<compile_context>
chip_gen: v7x
topology: tpu7x:2x2x1
jax: 0.10.0
libtpu: 0.0.40
codegen_flags: <defaults>
</compile_context>

<pallas_src>
import math
import numpy as np
import jax
import jax.numpy as jnp
from jax.experimental import pallas as pl
from jax.experimental.pallas import tpu as pltpu

# ----------------------------- hyperparameters ------------------------------
FS = 16000
N_FFT = 512
N_MELS = 80
N_MFCC = 80                    # MFCC(n_mfcc=self.n_mels) in the module
HOP = 160
N_FREQ = N_FFT // 2 + 1        # 257 one-sided bins
N_FREQ_USED = 256              # Nyquist bin dropped (its mel-fbank row is ~0)
N_LANE = 128                   # lane-padded mel / mfcc width (>= 80)
AMIN = 1e-10

DFT_IN_DTYPE = jnp.bfloat16     # frames + windowed-DFT basis (MXU fast path)
MEL_DCT_IN_DTYPE = jnp.bfloat16 # mel / DCT matmul inputs (f32 accumulation)
OUT_DTYPE = jnp.float32         # keep f32 output for module parity


# ------------------------- constant matrix builders -------------------------
def _hann_window(n):
    # periodic hann (torch.hann_window default periodic=True)
    i = np.arange(n, dtype=np.float64)
    return 0.5 - 0.5 * np.cos(2.0 * np.pi * i / n)


def _windowed_rdft_matrix():
    # Fused window + real/imag DFT basis:
    #   diag(hann) @ [cos | -sin]  -> (N_FFT, 2 * N_FREQ_USED)
    win = _hann_window(N_FFT)[:, None]
    n = np.arange(N_FFT, dtype=np.float64)[:, None]
    k = np.arange(N_FREQ_USED, dtype=np.float64)[None, :]
    ang = 2.0 * np.pi * n * k / N_FFT
    cos_m = win * np.cos(ang)
    sin_m = win * (-np.sin(ang))
    return np.concatenate([cos_m, sin_m], axis=1).astype(np.float32)


def _mel_filterbank():
    # torchaudio.functional.melscale_fbanks: htk mel scale, norm=None
    f_min, f_max = 0.0, FS / 2.0
    all_freqs = np.linspace(0.0, FS / 2.0, N_FREQ)

    def hz_to_mel(f):
        return 2595.0 * np.log10(1.0 + f / 700.0)

    def mel_to_hz(m):
        return 700.0 * (10.0 ** (m / 2595.0) - 1.0)

    m_pts = np.linspace(hz_to_mel(f_min), hz_to_mel(f_max), N_MELS + 2)
    f_pts = mel_to_hz(m_pts)
    f_diff = f_pts[1:] - f_pts[:-1]                         # (n_mels+1,)
    slopes = f_pts[None, :] - all_freqs[:, None]            # (n_freq, n_mels+2)
    down = -slopes[:, :-2] / f_diff[:-1]
    up = slopes[:, 2:] / f_diff[1:]
    fb = np.maximum(0.0, np.minimum(down, up))              # (257, n_mels)
    # Dropping the Nyquist bin is exact iff its filterbank row is zero.
    assert np.max(np.abs(fb[N_FREQ_USED:, :])) < 1e-6, "Nyquist fbank row != 0"
    fb_pad = np.zeros((N_FREQ_USED, N_LANE), dtype=np.float32)
    fb_pad[:, :N_MELS] = fb[:N_FREQ_USED, :].astype(np.float32)
    return fb_pad


def _dct_matrix():
    # torchaudio.functional.create_dct(n_mfcc, n_mels, norm="ortho"),
    # lane-padded to (N_LANE, N_LANE).  Zero rows kill the dummy -100 dB mel
    # columns; zero columns are sliced off in the wrapper.
    n = np.arange(N_MELS, dtype=np.float64)
    k = np.arange(N_MFCC, dtype=np.float64)[:, None]
    dct = np.cos(math.pi / N_MELS * (n + 0.5) * k)          # (n_mfcc, n_mels)
    dct[0] *= 1.0 / math.sqrt(2.0)
    dct *= math.sqrt(2.0 / N_MELS)
    dct_t = np.ascontiguousarray(dct.T)                     # (n_mels, n_mfcc)
    dct_pad = np.zeros((N_LANE, N_LANE), dtype=np.float32)
    dct_pad[:N_MELS, :N_MFCC] = dct_t.astype(np.float32)
    return dct_pad


# Built once at import; baked into the jitted executable as constants.
_DFT_NP = _windowed_rdft_matrix()
_MEL_NP = _mel_filterbank()
_DCT_NP = _dct_matrix()


# --------------------------------- kernel -----------------------------------
def mfcc_kernel(frames_ref, dft_ref, mel_ref, dct_ref, out_ref):
    # frames_ref: (TILE, N_FFT)          bf16 raw frame rows (window in dft)
    # dft_ref:    (N_FFT, 2*N_FREQ_USED) bf16 [win*cos | -win*sin]
    # mel_ref:    (N_FREQ_USED, N_LANE)  bf16 mel fbank, lane-padded cols
    # dct_ref:    (N_LANE, N_LANE)       bf16 DCT-II ortho, zero-padded
    # out_ref:    (TILE, N_LANE)         f32 mfcc (cols >= 80 are zero)
    spec = jnp.dot(frames_ref[...], dft_ref[...],
                   preferred_element_type=jnp.float32)       # (T, 512) [re|im]
    re = spec[:, :N_FREQ_USED]                               # lane-aligned slices
    im = spec[:, N_FREQ_USED:]
    power = re * re + im * im                                # |X|^2, f32
    mel = jnp.dot(power.astype(MEL_DCT_IN_DTYPE), mel_ref[...],
                  preferred_element_type=jnp.float32)
    log_mel = 10.0 * jnp.log10(jnp.maximum(mel, AMIN))       # amplitude_to_DB
    mfcc = jnp.dot(log_mel.astype(MEL_DCT_IN_DTYPE), dct_ref[...],
                   preferred_element_type=jnp.float32)       # DCT-II (ortho)
    out_ref[...] = mfcc.astype(out_ref.dtype)


def _pick_tile_rows(rows):
    # Largest tile that still leaves >= 2 grid steps (feeds both v7x TCs via
    # the "parallel" axis); tiny inputs fall back to a single 128-row step.
    for t in (1024, 512, 256, 128):
        if rows >= 2 * t:
            return t
    return 128


def _mfcc_pallas(frames_flat, dft_m, mel_fb, dct_m, tile_rows):
    rows = frames_flat.shape[0]
    assert rows % tile_rows == 0
    grid = (rows // tile_rows,)

    flops_per_row = (2 * N_FFT * (2 * N_FREQ_USED)        # DFT matmul
                     + 2 * N_FREQ_USED * N_LANE           # mel matmul
                     + 2 * N_LANE * N_LANE                # DCT matmul
                     + 4 * N_FREQ_USED + 3 * N_LANE)      # power + dB scaling
    bytes_accessed = (rows * N_FFT * frames_flat.dtype.itemsize
                      + rows * N_LANE * jnp.dtype(OUT_DTYPE).itemsize
                      + _DFT_NP.size * jnp.dtype(DFT_IN_DTYPE).itemsize
                      + _MEL_NP.size * jnp.dtype(MEL_DCT_IN_DTYPE).itemsize
                      + _DCT_NP.size * jnp.dtype(MEL_DCT_IN_DTYPE).itemsize)

    return pl.pallas_call(
        mfcc_kernel,
        out_shape=jax.ShapeDtypeStruct((rows, N_LANE), OUT_DTYPE),
        grid_spec=pltpu.PrefetchScalarGridSpec(
            num_scalar_prefetch=0,
            grid=grid,
            in_specs=[
                pl.BlockSpec((tile_rows, N_FFT), lambda i: (i, 0)),
                # constant (0,0) index maps: Mosaic fetches these once
                pl.BlockSpec((N_FFT, 2 * N_FREQ_USED), lambda i: (0, 0)),
                pl.BlockSpec((N_FREQ_USED, N_LANE), lambda i: (0, 0)),
                pl.BlockSpec((N_LANE, N_LANE), lambda i: (0, 0)),
            ],
            out_specs=pl.BlockSpec((tile_rows, N_LANE), lambda i: (i, 0)),
        ),
        compiler_params=pltpu.CompilerParams(
            dimension_semantics=("parallel",)),
        cost_estimate=pl.CostEstimate(
            flops=rows * flops_per_row,
            transcendentals=rows * N_LANE,
            bytes_accessed=bytes_accessed),
    )(frames_flat, dft_m, mel_fb, dct_m)


# ------------------------------- module wrapper ------------------------------
@jax.jit
def _mfcc_forward_jit(feat):
    B, T = feat.shape
    pad = N_FFT // 2
    # reflect padding needs at least pad+1 samples (static check at trace time)
    assert T > pad, "input too short for reflect padding (need > n_fft//2 samples)"

    # Cast upstream: the 3.2x-expanded frames matrix is materialized once, in bf16.
    wave = feat.astype(DFT_IN_DTYPE)
    xp = jnp.pad(wave, ((0, 0), (pad, pad)), mode="reflect")
    n_frames = 1 + T // HOP
    idx = jnp.arange(n_frames)[:, None] * HOP + jnp.arange(N_FFT)[None, :]
    frames = xp[:, idx]                                      # (B, n_frames, N_FFT) bf16
    frames_flat = frames.reshape(B * n_frames, N_FFT)

    rows = B * n_frames
    tile_rows = _pick_tile_rows(rows)
    rows_pad = ((rows + tile_rows - 1) // tile_rows) * tile_rows
    frames_flat = jnp.pad(frames_flat, ((0, rows_pad - rows), (0, 0)))

    # Deterministic "parameters": baked compile-time constants (no per-call upload).
    dft_m = jnp.asarray(_DFT_NP, dtype=DFT_IN_DTYPE)
    mel_fb = jnp.asarray(_MEL_NP, dtype=MEL_DCT_IN_DTYPE)
    dct_m = jnp.asarray(_DCT_NP, dtype=MEL_DCT_IN_DTYPE)

    out = _mfcc_pallas(frames_flat, dft_m, mel_fb, dct_m, tile_rows)  # (rows_pad, 128)
    mfcc_feat = out[:rows, :N_MFCC].reshape(B, n_frames, N_MFCC)

    # module fills lens with mfcc_feat.size(1) for every batch element
    # TODO(synk): torch uses int64 (torch.long); default JAX config gives int32.
    output_lens = jnp.full((B,), n_frames, dtype=jnp.int32)
    return mfcc_feat, output_lens


def mfcc_forward(feat, ilens=None):
    """feat: (B, num_samples) float32 raw waveform.
    Returns (mfcc_feat (B, frames, n_mfcc) float32, output_lens (B,) int32)."""
    return _mfcc_forward_jit(feat)


if __name__ == "__main__":
    key = jax.random.PRNGKey(0)
    B, NUM_SAMPLES = 2, 1600          # 2 waveforms, 0.1 s @ 16 kHz -> 11 frames
    feat = jax.random.normal(key, (B, NUM_SAMPLES), dtype=jnp.float32)

    mfcc_feat, output_lens = mfcc_forward(feat)
    jax.block_until_ready((mfcc_feat, output_lens))

    assert mfcc_feat.shape == (B, 1 + NUM_SAMPLES // HOP, N_MFCC), mfcc_feat.shape
    assert output_lens.shape == (B,)
    assert bool(jnp.all(jnp.isfinite(mfcc_feat)))
    assert bool(jnp.all(output_lens == 1 + NUM_SAMPLES // HOP))
    print("KERNEL_OK")
</pallas_src>

<mosaic_0001>
module attributes {stable_mosaic.version = 11 : i64} {
  func.func @mfcc_kernel(%arg0: i32, %arg1: memref<128x512xbf16, #tpu.memory_space<vmem>>, %arg2: memref<512x512xbf16, #tpu.memory_space<vmem>>, %arg3: memref<256x128xbf16, #tpu.memory_space<vmem>>, %arg4: memref<128x128xbf16, #tpu.memory_space<vmem>>, %arg5: memref<128x128xf32, #tpu.memory_space<vmem>>) attributes {dimension_semantics = [#tpu.dimension_semantics<parallel>], iteration_bounds = array<i64: 1>, scalar_prefetch = 0 : i64, scratch_operands = 0 : i64, tpu.core_type = #tpu.core_type<tc>, window_params = [{transform_indices = @transform_0, window_bounds = array<i64: 128, 512>}, {pipeline_mode = #tpu.pipeline_mode<synchronous>, transform_indices = @transform_1, window_bounds = array<i64: 512, 512>}, {pipeline_mode = #tpu.pipeline_mode<synchronous>, transform_indices = @transform_2, window_bounds = array<i64: 256, 128>}, {pipeline_mode = #tpu.pipeline_mode<synchronous>, transform_indices = @transform_3, window_bounds = array<i64: 128, 128>}, {transform_indices = @transform_4, window_bounds = array<i64: 128, 128>}]} {
    %c0 = arith.constant 0 : index
    %c0_0 = arith.constant 0 : index
    %0 = vector.load %arg1[%c0, %c0_0] : memref<128x512xbf16, #tpu.memory_space<vmem>>, vector<128x512xbf16>
    %c0_1 = arith.constant 0 : index
    %c0_2 = arith.constant 0 : index
    %1 = vector.load %arg2[%c0_1, %c0_2] : memref<512x512xbf16, #tpu.memory_space<vmem>>, vector<512x512xbf16>
    %cst = arith.constant dense<0.000000e+00> : vector<128x512xf32>
    %2 = tpu.matmul %0, %1, %cst {dimension_numbers = #tpu.dot_dimension_numbers<[1], [0], [0], [1], [0, 0, 1, 1], [], []>} : vector<128x512xbf16>, vector<512x512xbf16>, vector<128x512xf32> -> vector<128x512xf32>
    %3 = vector.extract_strided_slice %2 {offsets = [0, 0], sizes = [128, 256], strides = [1, 1]} : vector<128x512xf32> to vector<128x256xf32>
    %4 = vector.extract_strided_slice %2 {offsets = [0, 256], sizes = [128, 256], strides = [1, 1]} : vector<128x512xf32> to vector<128x256xf32>
    %5 = arith.mulf %3, %3 : vector<128x256xf32>
    %6 = arith.mulf %4, %4 : vector<128x256xf32>
    %7 = arith.addf %5, %6 : vector<128x256xf32>
    %8 = arith.truncf %7 : vector<128x256xf32> to vector<128x256xbf16>
    %c0_3 = arith.constant 0 : index
    %c0_4 = arith.constant 0 : index
    %9 = vector.load %arg3[%c0_3, %c0_4] : memref<256x128xbf16, #tpu.memory_space<vmem>>, vector<256x128xbf16>
    %cst_5 = arith.constant dense<0.000000e+00> : vector<128x128xf32>
    %10 = tpu.matmul %8, %9, %cst_5 {dimension_numbers = #tpu.dot_dimension_numbers<[1], [0], [0], [1], [0, 0, 1, 1], [], []>} : vector<128x256xbf16>, vector<256x128xbf16>, vector<128x128xf32> -> vector<128x128xf32>
    %cst_6 = arith.constant 1.000000e-10 : f32
    %11 = vector.broadcast %cst_6 : f32 to vector<128x128xf32>
    %12 = arith.maximumf %10, %11 : vector<128x128xf32>
    %13 = math.log %12 : vector<128x128xf32>
    %cst_7 = arith.constant 0.434294492 : f32
    %14 = vector.broadcast %cst_7 : f32 to vector<128x128xf32>
    %15 = arith.mulf %13, %14 : vector<128x128xf32>
    %cst_8 = arith.constant 1.000000e+01 : f32
    %16 = vector.broadcast %cst_8 : f32 to vector<128x128xf32>
    %17 = arith.mulf %16, %15 : vector<128x128xf32>
    %18 = arith.truncf %17 : vector<128x128xf32> to vector<128x128xbf16>
    %c0_9 = arith.constant 0 : index
    %c0_10 = arith.constant 0 : index
    %19 = vector.load %arg4[%c0_9, %c0_10] : memref<128x128xbf16, #tpu.memory_space<vmem>>, vector<128x128xbf16>
    %cst_11 = arith.constant dense<0.000000e+00> : vector<128x128xf32>
    %20 = tpu.matmul %18, %19, %cst_11 {dimension_numbers = #tpu.dot_dimension_numbers<[1], [0], [0], [1], [0, 0, 1, 1], [], []>} : vector<128x128xbf16>, vector<128x128xbf16>, vector<128x128xf32> -> vector<128x128xf32>
    %c0_12 = arith.constant 0 : index
    %c0_13 = arith.constant 0 : index
    %21 = vector.load %arg5[%c0_12, %c0_13] : memref<128x128xf32, #tpu.memory_space<vmem>>, vector<128x128xf32>
    tpu.vector_store %arg5[%c0_12, %c0_13], %20 {strides = array<i32>} : memref<128x128xf32, #tpu.memory_space<vmem>>, vector<128x128xf32>,
    return
  }
  func.func @transform_0(%arg0: i32) -> (i32, i32) {
    %c0_i32 = arith.constant 0 : i32
    %c0_i32_0 = arith.constant 0 : i32
    return %arg0, %c0_i32 : i32, i32
  }
  func.func @transform_1(%arg0: i32) -> (i32, i32) {
    %c0_i32 = arith.constant 0 : i32
    %c0_i32_0 = arith.constant 0 : i32
    %c0_i32_1 = arith.constant 0 : i32
    return %c0_i32, %c0_i32_0 : i32, i32
  }
  func.func @transform_2(%arg0: i32) -> (i32, i32) {
    %c0_i32 = arith.constant 0 : i32
    %c0_i32_0 = arith.constant 0 : i32
    %c0_i32_1 = arith.constant 0 : i32
    return %c0_i32, %c0_i32_0 : i32, i32
  }
  func.func @transform_3(%arg0: i32) -> (i32, i32) {
    %c0_i32 = arith.constant 0 : i32
    %c0_i32_0 = arith.constant 0 : i32
    %c0_i32_1 = arith.constant 0 : i32
    return %c0_i32, %c0_i32_0 : i32, i32
  }
  func.func @transform_4(%arg0: i32) -> (i32, i32) {
    %c0_i32 = arith.constant 0 : i32
    %c0_i32_0 = arith.constant 0 : i32
    return %arg0, %c0_i32 : i32, i32
  }
}

</mosaic_0001>

<llo_original>
// kernel: _mfcc_forward_jit.1
$region0: #{_mfcc_forward_jit.1}
  #allocation0 [shape = 'u32[]', space=smem, size = 0x4, offset = 0x4, fixed_abs, tag = 'smem constant byte address 0x4 - core index']
  #allocation1 [shape = 'u32[144,128]{1,0:T(1,128)}', space=vmem, size = 0x12000, scoped, tag = 'internal scratch']
  %s0 = inlined_call_operand.vmem [shape: bf16[128,512], index: 0, kind: input, shape index: {}]
  %s1 = inlined_call_operand.vmem [shape: bf16[512,512], index: 1, kind: input, shape index: {}]
  %s2 = inlined_call_operand.vmem [shape: bf16[256,128], index: 2, kind: input, shape index: {}]
  %s3 = inlined_call_operand.vmem [shape: bf16[128,128], index: 3, kind: input, shape index: {}]
  %s4 = inlined_call_operand.vmem [shape: f32[128,128], index: 4, kind: output, shape index: {}]
  %s5 = sld [smem:[#allocation0]]
  $region26: #{_mfcc_forward_jit.1} parent=0
    _
  %s7 = ssub.s32 1, %s5
  %s8 = scalar_select 0, %s7, %s5
  // Predicated region
  $region2: #{_mfcc_forward_jit.1} parent=0 // pred_check
    _
  $region3: #{_mfcc_forward_jit.1} parent=0 // pred_check_branch
    %10 = sbr.rel (0) target = $region5
  $region4: #{_mfcc_forward_jit.1} parent=0 // pred_region
    _
  $region5: #{_mfcc_forward_jit.1} parent=0 // pred_fallthru
    _
  // Predicated region
  $region6: #{_mfcc_forward_jit.1} parent=0 // pred_check
    _
  $region7: #{_mfcc_forward_jit.1} parent=0 // pred_check_branch
    %12 = sbr.rel (0) target = $region9
  $region8: #{_mfcc_forward_jit.1} parent=0 // pred_region
    _
  $region9: #{_mfcc_forward_jit.1} parent=0 // pred_fallthru
    _
  // Predicated region
  $region10: #{_mfcc_forward_jit.1} parent=0 // pred_check
    _
  $region11: #{_mfcc_forward_jit.1} parent=0 // pred_check_branch
    %14 = sbr.rel (0) target = $region13
  $region12: #{_mfcc_forward_jit.1} parent=0 // pred_region
    _
  $region13: #{_mfcc_forward_jit.1} parent=0 // pred_fallthru
    _
  // Predicated region
  $region14: #{_mfcc_forward_jit.1} parent=0 // pred_check
    _
  $region15: #{_mfcc_forward_jit.1} parent=0 // pred_check_branch
    %16 = sbr.rel (0) target = $region17
  $region16: #{_mfcc_forward_jit.1} parent=0 // pred_region
    _
  $region17: #{_mfcc_forward_jit.1} parent=0 // pred_fallthru
    _
  %v18 = vld [vmem:[%s0] sm:$0xff]
  %v19 = vld [vmem:[%s0 + $0x8] sm:$0xff]
  %v20 = vld [vmem:[%s0 + $0x10] sm:$0xff]
  %v21 = vld [vmem:[%s0 + $0x18] sm:$0xff]
  %v22 = vld [vmem:[%s0 + $0x20] sm:$0xff]
  %v23 = vld [vmem:[%s0 + $0x28] sm:$0xff]
  %v24 = vld [vmem:[%s0 + $0x30] sm:$0xff]
  %v25 = vld [vmem:[%s0 + $0x38] sm:$0xff]
  %v26 = vld [vmem:[%s0 + $0x40] sm:$0xff]
  %v27 = vld [vmem:[%s0 + $0x48] sm:$0xff]
  %v28 = vld [vmem:[%s0 + $0x50] sm:$0xff]
  %v29 = vld [vmem:[%s0 + $0x58] sm:$0xff]
  %v30 = vld [vmem:[%s0 + $0x60] sm:$0xff]
  %v31 = vld [vmem:[%s0 + $0x68] sm:$0xff]
  %v32 = vld [vmem:[%s0 + $0x70] sm:$0xff]
  %v33 = vld [vmem:[%s0 + $0x78] sm:$0xff]
  %v34 = vld [vmem:[%s0 + $0x80] sm:$0xff]
  %v35 = vld [vmem:[%s0 + $0x88] sm:$0xff]
  %v36 = vld [vmem:[%s0 + $0x90] sm:$0xff]
  %v37 = vld [vmem:[%s0 + $0x98] sm:$0xff]
  %v38 = vld [vmem:[%s0 + $0xa0] sm:$0xff]
  %v39 = vld [vmem:[%s0 + $0xa8] sm:$0xff]
  %v40 = vld [vmem:[%s0 + $0xb0] sm:$0xff]
  %v41 = vld [vmem:[%s0 + $0xb8] sm:$0xff]
  %v42 = vld [vmem:[%s0 + $0xc0] sm:$0xff]
  %v43 = vld [vmem:[%s0 + $0xc8] sm:$0xff]
  %v44 = vld [vmem:[%s0 + $0xd0] sm:$0xff]
  %v45 = vld [vmem:[%s0 + $0xd8] sm:$0xff]
  %v46 = vld [vmem:[%s0 + $0xe0] sm:$0xff]
  %v47 = vld [vmem:[%s0 + $0xe8] sm:$0xff]
  %v48 = vld [vmem:[%s0 + $0xf0] sm:$0xff]
  %v49 = vld [vmem:[%s0 + $0xf8] sm:$0xff]
  %v50 = vld [vmem:[%s1] sm:$0xff]
  %v51 = vld [vmem:[%s1 + $0x8] sm:$0xff]
  %v52 = vld [vmem:[%s1 + $0x10] sm:$0xff]
  %v53 = vld [vmem:[%s1 + $0x18] sm:$0xff]
  %v54 = vld [vmem:[%s1 + $0x20] sm:$0xff]
  %v55 = vld [vmem:[%s1 + $0x28] sm:$0xff]
  %v56 = vld [vmem:[%s1 + $0x30] sm:$0xff]
  %v57 = vld [vmem:[%s1 + $0x38] sm:$0xff]
  %v58 = vld [vmem:[%s1 + $0x40] sm:$0xff]
  %v59 = vld [vmem:[%s1 + $0x48] sm:$0xff]
  %v60 = vld [vmem:[%s1 + $0x50] sm:$0xff]
  %v61 = vld [vmem:[%s1 + $0x58] sm:$0xff]
  %v62 = vld [vmem:[%s1 + $0x60] sm:$0xff]
  %v63 = vld [vmem:[%s1 + $0x68] sm:$0xff]
  %v64 = vld [vmem:[%s1 + $0x70] sm:$0xff]
  %v65 = vld [vmem:[%s1 + $0x78] sm:$0xff]
  %v66 = vld [vmem:[%s1 + $0x80] sm:$0xff]
  %v67 = vld [vmem:[%s1 + $0x88] sm:$0xff]
  %v68 = vld [vmem:[%s1 + $0x90] sm:$0xff]
  %v69 = vld [vmem:[%s1 + $0x98] sm:$0xff]
  %v70 = vld [vmem:[%s1 + $0xa0] sm:$0xff]
  %v71 = vld [vmem:[%s1 + $0xa8] sm:$0xff]
  %v72 = vld [vmem:[%s1 + $0xb0] sm:$0xff]
  %v73 = vld [vmem:[%s1 + $0xb8] sm:$0xff]
  %v74 = vld [vmem:[%s1 + $0xc0] sm:$0xff]
  %v75 = vld [vmem:[%s1 + $0xc8] sm:$0xff]
  %v76 = vld [vmem:[%s1 + $0xd0] sm:$0xff]
  %v77 = vld [vmem:[%s1 + $0xd8] sm:$0xff]
  %v78 = vld [vmem:[%s1 + $0xe0] sm:$0xff]
  %v79 = vld [vmem:[%s1 + $0xe8] sm:$0xff]
  %v80 = vld [vmem:[%s1 + $0xf0] sm:$0xff]
  %v81 = vld [vmem:[%s1 + $0xf8] sm:$0xff]
  %v82 = vld [vmem:[%s1 + $0x100] sm:$0xff]
  %v83 = vld [vmem:[%s1 + $0x108] sm:$0xff]
  %v84 = vld [vmem:[%s1 + $0x110] sm:$0xff]
  %v85 = vld [vmem:[%s1 + $0x118] sm:$0xff]
  %v86 = vld [vmem:[%s1 + $0x120] sm:$0xff]
  %v87 = vld [vmem:[%s1 + $0x128] sm:$0xff]
  %v88 = vld [vmem:[%s1 + $0x130] sm:$0xff]
  %v89 = vld [vmem:[%s1 + $0x138] sm:$0xff]
  %v90 = vld [vmem:[%s1 + $0x140] sm:$0xff]
  %v91 = vld [vmem:[%s1 + $0x148] sm:$0xff]
  %v92 = vld [vmem:[%s1 + $0x150] sm:$0xff]
  %v93 = vld [vmem:[%s1 + $0x158] sm:$0xff]
  %v94 = vld [vmem:[%s1 + $0x160] sm:$0xff]
  %v95 = vld [vmem:[%s1 + $0x168] sm:$0xff]
  %v96 = vld [vmem:[%s1 + $0x170] sm:$0xff]
  %v97 = vld [vmem:[%s1 + $0x178] sm:$0xff]
  %v98 = vld [vmem:[%s1 + $0x180] sm:$0xff]
  %v99 = vld [vmem:[%s1 + $0x188] sm:$0xff]
  %v100 = vld [vmem:[%s1 + $0x190] sm:$0xff]
  %v101 = vld [vmem:[%s1 + $0x198] sm:$0xff]
  %v102 = vld [vmem:[%s1 + $0x1a0] sm:$0xff]
  %v103 = vld [vmem:[%s1 + $0x1a8] sm:$0xff]
  %v104 = vld [vmem:[%s1 + $0x1b0] sm:$0xff]
  %v105 = vld [vmem:[%s1 + $0x1b8] sm:$0xff]
  %v106 = vld [vmem:[%s1 + $0x1c0] sm:$0xff]
  %v107 = vld [vmem:[%s1 + $0x1c8] sm:$0xff]
  %v108 = vld [vmem:[%s1 + $0x1d0] sm:$0xff]
  %v109 = vld [vmem:[%s1 + $0x1d8] sm:$0xff]
  %v110 = vld [vmem:[%s1 + $0x1e0] sm:$0xff]
  %v111 = vld [vmem:[%s1 + $0x1e8] sm:$0xff]
  %v112 = vld [vmem:[%s1 + $0x1f0] sm:$0xff]
  %v113 = vld [vmem:[%s1 + $0x1f8] sm:$0xff]
  %v114 = vld [vmem:[%s1 + $0x200] sm:$0xff]
  %v115 = vld [vmem:[%s1 + $0x208] sm:$0xff]
  %v116 = vld [vmem:[%s1 + $0x210] sm:$0xff]
  %v117 = vld [vmem:[%s1 + $0x218] sm:$0xff]
  %v118 = vld [vmem:[%s1 + $0x220] sm:$0xff]
  %v119 = vld [vmem:[%s1 + $0x228] sm:$0xff]
  %v120 = vld [vmem:[%s1 + $0x230] sm:$0xff]
  %v121 = vld [vmem:[%s1 + $0x238] sm:$0xff]
  %v122 = vld [vmem:[%s1 + $0x240] sm:$0xff]
  %v123 = vld [vmem:[%s1 + $0x248] sm:$0xff]
  %v124 = vld [vmem:[%s1 + $0x250] sm:$0xff]
  %v125 = vld [vmem:[%s1 + $0x258] sm:$0xff]
  %v126 = vld [vmem:[%s1 + $0x260] sm:$0xff]
  %v127 = vld [vmem:[%s1 + $0x268] sm:$0xff]
  %v128 = vld [vmem:[%s1 + $0x270] sm:$0xff]
  %v129 = vld [vmem:[%s1 + $0x278] sm:$0xff]
  %v130 = vld [vmem:[%s1 + $0x280] sm:$0xff]
  %v131 = vld [vmem:[%s1 + $0x288] sm:$0xff]
  %v132 = vld [vmem:[%s1 + $0x290] sm:$0xff]
  %v133 = vld [vmem:[%s1 + $0x298] sm:$0xff]
  %v134 = vld [vmem:[%s1 + $0x2a0] sm:$0xff]
  %v135 = vld [vmem:[%s1 + $0x2a8] sm:$0xff]
  %v136 = vld [vmem:[%s1 + $0x2b0] sm:$0xff]
  %v137 = vld [vmem:[%s1 + $0x2b8] sm:$0xff]
  %v138 = vld [vmem:[%s1 + $0x2c0] sm:$0xff]
  %v139 = vld [vmem:[%s1 + $0x2c8] sm:$0xff]
  %v140 = vld [vmem:[%s1 + $0x2d0] sm:$0xff]
  %v141 = vld [vmem:[%s1 + $0x2d8] sm:$0xff]
  %v142 = vld [vmem:[%s1 + $0x2e0] sm:$0xff]
  %v143 = vld [vmem:[%s1 + $0x2e8] sm:$0xff]
  %v144 = vld [vmem:[%s1 + $0x2f0] sm:$0xff]
  %v145 = vld [vmem:[%s1 + $0x2f8] sm:$0xff]
  %v146 = vld [vmem:[%s1 + $0x300] sm:$0xff]
  %v147 = vld [vmem:[%s1 + $0x308] sm:$0xff]
  %v148 = vld [vmem:[%s1 + $0x310] sm:$0xff]
  %v149 = vld [vmem:[%s1 + $0x318] sm:$0xff]
  %v150 = vld [vmem:[%s1 + $0x320] sm:$0xff]
  %v151 = vld [vmem:[%s1 + $0x328] sm:$0xff]
  %v152 = vld [vmem:[%s1 + $0x330] sm:$0xff]
  %v153 = vld [vmem:[%s1 + $0x338] sm:$0xff]
  %v154 = vld [vmem:[%s1 + $0x340] sm:$0xff]
  %v155 = vld [vmem:[%s1 + $0x348] sm:$0xff]
  %v156 = vld [vmem:[%s1 + $0x350] sm:$0xff]
  %v157 = vld [vmem:[%s1 + $0x358] sm:$0xff]
  %v158 = vld [vmem:[%s1 + $0x360] sm:$0xff]
  %v159 = vld [vmem:[%s1 + $0x368] sm:$0xff]
  %v160 = vld [vmem:[%s1 + $0x370] sm:$0xff]
  %v161 = vld [vmem:[%s1 + $0x378] sm:$0xff]
  %v162 = vld [vmem:[%s1 + $0x380] sm:$0xff]
  %v163 = vld [vmem:[%s1 + $0x388] sm:$0xff]
  %v164 = vld [vmem:[%s1 + $0x390] sm:$0xff]
  %v165 = vld [vmem:[%s1 + $0x398] sm:$0xff]
  %v166 = vld [vmem:[%s1 + $0x3a0] sm:$0xff]
  %v167 = vld [vmem:[%s1 + $0x3a8] sm:$0xff]
  %v168 = vld [vmem:[%s1 + $0x3b0] sm:$0xff]
  %v169 = vld [vmem:[%s1 + $0x3b8] sm:$0xff]
  %v170 = vld [vmem:[%s1 + $0x3c0] sm:$0xff]
  %v171 = vld [vmem:[%s1 + $0x3c8] sm:$0xff]
  %v172 = vld [vmem:[%s1 + $0x3d0] sm:$0xff]
  %v173 = vld [vmem:[%s1 + $0x3d8] sm:$0xff]
  %v174 = vld [vmem:[%s1 + $0x3e0] sm:$0xff]
  %v175 = vld [vmem:[%s1 + $0x3e8] sm:$0xff]
  %v176 = vld [vmem:[%s1 + $0x3f0] sm:$0xff]
  %v177 = vld [vmem:[%s1 + $0x3f8] sm:$0xff]
  %v210 = vunpack.c.l.b16 %v18
  %v211 = vunpack.c.h.b16 %v18
  %v212 = vunpack.c.l.b16 %v19
  %v213 = vunpack.c.h.b16 %v19
  %v214 = vunpack.c.l.b16 %v20
  %v215 = vunpack.c.h.b16 %v20
  %v216 = vunpack.c.l.b16 %v21
  %v217 = vunpack.c.h.b16 %v21
  %v218 = vunpack.c.l.b16 %v22
  %v219 = vunpack.c.h.b16 %v22
  %v220 = vunpack.c.l.b16 %v23
  %v221 = vunpack.c.h.b16 %v23
  %v222 = vunpack.c.l.b16 %v24
  %v223 = vunpack.c.h.b16 %v24
  %v224 = vunpack.c.l.b16 %v25
  %v225 = vunpack.c.h.b16 %v25
  %v226 = vunpack.c.l.b16 %v26
  %v227 = vunpack.c.h.b16 %v26
  %v228 = vunpack.c.l.b16 %v27
  %v229 = vunpack.c.h.b16 %v27
  %v230 = vunpack.c.l.b16 %v28
  %v231 = vunpack.c.h.b16 %v28
  %v232 = vunpack.c.l.b16 %v29
  %v233 = vunpack.c.h.b16 %v29
  %v234 = vunpack.c.l.b16 %v30
  %v235 = vunpack.c.h.b16 %v30
  %v236 = vunpack.c.l.b16 %v31
  %v237 = vunpack.c.h.b16 %v31
  %v238 = vunpack.c.l.b16 %v32
  %v239 = vunpack.c.h.b16 %v32
  %v240 = vunpack.c.l.b16 %v33
  %v241 = vunpack.c.h.b16 %v33
  %v242 = vunpack.c.l.b16 %v34
  %v243 = vunpack.c.h.b16 %v34
  %v244 = vunpack.c.l.b16 %v35
  %v245 = vunpack.c.h.b16 %v35
  %v246 = vunpack.c.l.b16 %v36
  %v247 = vunpack.c.h.b16 %v36
  %v248 = vunpack.c.l.b16 %v37
  %v249 = vunpack.c.h.b16 %v37
  %v250 = vunpack.c.l.b16 %v38
  %v251 = vunpack.c.h.b16 %v38
  %v252 = vunpack.c.l.b16 %v39
  %v253 = vunpack.c.h.b16 %v39
  %v254 = vunpack.c.l.b16 %v40
  %v255 = vunpack.c.h.b16 %v40
  %v256 = vunpack.c.l.b16 %v41
  %v257 = vunpack.c.h.b16 %v41
  %v258 = vunpack.c.l.b16 %v42
  %v259 = vunpack.c.h.b16 %v42
  %v260 = vunpack.c.l.b16 %v43
  %v261 = vunpack.c.h.b16 %v43
  %v262 = vunpack.c.l.b16 %v44
  %v263 = vunpack.c.h.b16 %v44
  %v264 = vunpack.c.l.b16 %v45
  %v265 = vunpack.c.h.b16 %v45
  %v266 = vunpack.c.l.b16 %v46
  %v267 = vunpack.c.h.b16 %v46
  %v268 = vunpack.c.l.b16 %v47
  %v269 = vunpack.c.h.b16 %v47
  %v270 = vunpack.c.l.b16 %v48
  %v271 = vunpack.c.h.b16 %v48
  %v272 = vunpack.c.l.b16 %v49
  %v273 = vunpack.c.h.b16 %v49
  %v274 = vpack.c.b16 %v214, %v210
  %v275 = vpack.c.b16 %v215, %v211
  %v276 = vpack.c.b16 %v216, %v212
  %v277 = vpack.c.b16 %v217, %v213
  %v278 = vpack.c.b16 %v222, %v218
  %v279 = vpack.c.b16 %v223, %v219
  %v280 = vpack.c.b16 %v224, %v220
  %v281 = vpack.c.b16 %v225, %v221
  %v282 = vpack.c.b16 %v230, %v226
  %v283 = vpack.c.b16 %v231, %v227
  %v284 = vpack.c.b16 %v232, %v228
  %v285 = vpack.c.b16 %v233, %v229
  %v286 = vpack.c.b16 %v238, %v234
  %v287 = vpack.c.b16 %v239, %v235
  %v288 = vpack.c.b16 %v240, %v236
  %v289 = vpack.c.b16 %v241, %v237
  %v290 = vpack.c.b16 %v246, %v242
  %v291 = vpack.c.b16 %v247, %v243
  %v292 = vpack.c.b16 %v248, %v244
  %v293 = vpack.c.b16 %v249, %v245
  %v294 = vpack.c.b16 %v254, %v250
  %v295 = vpack.c.b16 %v255, %v251
  %v296 = vpack.c.b16 %v256, %v252
  %v297 = vpack.c.b16 %v257, %v253
  %v298 = vpack.c.b16 %v262, %v258
  %v299 = vpack.c.b16 %v263, %v259
  %v300 = vpack.c.b16 %v264, %v260
  %v301 = vpack.c.b16 %v265, %v261
  %v302 = vpack.c.b16 %v270, %v266
  %v303 = vpack.c.b16 %v271, %v267
  %v304 = vpack.c.b16 %v272, %v268
  %v305 = vpack.c.b16 %v273, %v269
  %v466 = vunpack.c.l.b16 %v50
  %v467 = vunpack.c.h.b16 %v50
  %v468 = vunpack.c.l.b16 %v51
  %v469 = vunpack.c.h.b16 %v51
  %v470 = vunpack.c.l.b16 %v52
  %v471 = vunpack.c.h.b16 %v52
  %v472 = vunpack.c.l.b16 %v53
  %v473 = vunpack.c.h.b16 %v53
  %v474 = vunpack.c.l.b16 %v54
  %v475 = vunpack.c.h.b16 %v54
  %v476 = vunpack.c.l.b16 %v55
  %v477 = vunpack.c.h.b16 %v55
  %v478 = vunpack.c.l.b16 %v56
  %v479 = vunpack.c.h.b16 %v56
  %v480 = vunpack.c.l.b16 %v57
  %v481 = vunpack.c.h.b16 %v57
  %v482 = vunpack.c.l.b16 %v58
  %v483 = vunpack.c.h.b16 %v58
  %v484 = vunpack.c.l.b16 %v59
  %v485 = vunpack.c.h.b16 %v59
  %v486 = vunpack.c.l.b16 %v60
  %v487 = vunpack.c.h.b16 %v60
  %v488 = vunpack.c.l.b16 %v61
  %v489 = vunpack.c.h.b16 %v61
  %v490 = vunpack.c.l.b16 %v62
  %v491 = vunpack.c.h.b16 %v62
  %v492 = vunpack.c.l.b16 %v63
  %v493 = vunpack.c.h.b16 %v63
  %v494 = vunpack.c.l.b16 %v64
  %v495 = vunpack.c.h.b16 %v64
  %v496 = vunpack.c.l.b16 %v65
  %v497 = vunpack.c.h.b16 %v65
  %v498 = vunpack.c.l.b16 %v66
  %v499 = vunpack.c.h.b16 %v66
  %v500 = vunpack.c.l.b16 %v67
  %v501 = vunpack.c.h.b16 %v67
  %v502 = vunpack.c.l.b16 %v68
  %v503 = vunpack.c.h.b16 %v68
  %v504 = vunpack.c.l.b16 %v69
  %v505 = vunpack.c.h.b16 %v69
  %v506 = vunpack.c.l.b16 %v70
  %v507 = vunpack.c.h.b16 %v70
  %v508 = vunpack.c.l.b16 %v71
  %v509 = vunpack.c.h.b16 %v71
  %v510 = vunpack.c.l.b16 %v72
  %v511 = vunpack.c.h.b16 %v72
  %v512 = vunpack.c.l.b16 %v73
  %v513 = vunpack.c.h.b16 %v73
  %v514 = vunpack.c.l.b16 %v74
  %v515 = vunpack.c.h.b16 %v74
  %v516 = vunpack.c.l.b16 %v75
  %v517 = vunpack.c.h.b16 %v75
  %v518 = vunpack.c.l.b16 %v76
  %v519 = vunpack.c.h.b16 %v76
  %v520 = vunpack.c.l.b16 %v77
  %v521 = vunpack.c.h.b16 %v77
  %v522 = vunpack.c.l.b16 %v78
  %v523 = vunpack.c.h.b16 %v78
  %v524 = vunpack.c.l.b16 %v79
  %v525 = vunpack.c.h.b16 %v79
  %v526 = vunpack.c.l.b16 %v80
  %v527 = vunpack.c.h.b16 %v80
  %v528 = vunpack.c.l.b16 %v81
  %v529 = vunpack.c.h.b16 %v81
  %v530 = vunpack.c.l.b16 %v82
  %v531 = vunpack.c.h.b16 %v82
  %v532 = vunpack.c.l.b16 %v83
  %v533 = vunpack.c.h.b16 %v83
  %v534 = vunpack.c.l.b16 %v84
  %v535 = vunpack.c.h.b16 %v84
  %v536 = vunpack.c.l.b16 %v85
  %v537 = vunpack.c.h.b16 %v85
  %v538 = vunpack.c.l.b16 %v86
  %v539 = vunpack.c.h.b16 %v86
  %v540 = vunpack.c.l.b16 %v87
  %v541 = vunpack.c.h.b16 %v87
  %v542 = vunpack.c.l.b16 %v88
  %v543 = vunpack.c.h.b16 %v88
  %v544 = vunpack.c.l.b16 %v89
  %v545 = vunpack.c.h.b16 %v89
  %v546 = vunpack.c.l.b16 %v90
  %v547 = vunpack.c.h.b16 %v90
  %v548 = vunpack.c.l.b16 %v91
  %v549 = vunpack.c.h.b16 %v91
  %v550 = vunpack.c.l.b16 %v92
  %v551 = vunpack.c.h.b16 %v92
  %v552 = vunpack.c.l.b16 %v93
  %v553 = vunpack.c.h.b16 %v93
  %v554 = vunpack.c.l.b16 %v94
  %v555 = vunpack.c.h.b16 %v94
  %v556 = vunpack.c.l.b16 %v95
  %v557 = vunpack.c.h.b16 %v95
  %v558 = vunpack.c.l.b16 %v96
  %v559 = vunpack.c.h.b16 %v96
  %v560 = vunpack.c.l.b16 %v97
  %v561 = vunpack.c.h.b16 %v97
  %v562 = vunpack.c.l.b16 %v98
  %v563 = vunpack.c.h.b16 %v98
  %v564 = vunpack.c.l.b16 %v99
  %v565 = vunpack.c.h.b16 %v99
  %v566 = vunpack.c.l.b16 %v100
  %v567 = vunpack.c.h.b16 %v100
  %v568 = vunpack.c.l.b16 %v101
  %v569 = vunpack.c.h.b16 %v101
  %v570 = vunpack.c.l.b16 %v102
  %v571 = vunpack.c.h.b16 %v102
  %v572 = vunpack.c.l.b16 %v103
  %v573 = vunpack.c.h.b16 %v103
  %v574 = vunpack.c.l.b16 %v104
  %v575 = vunpack.c.h.b16 %v104
  %v576 = vunpack.c.l.b16 %v105
  %v577 = vunpack.c.h.b16 %v105
  %v578 = vunpack.c.l.b16 %v106
  %v579 = vunpack.c.h.b16 %v106
  %v580 = vunpack.c.l.b16 %v107
  %v581 = vunpack.c.h.b16 %v107
  %v582 = vunpack.c.l.b16 %v108
  %v583 = vunpack.c.h.b16 %v108
  %v584 = vunpack.c.l.b16 %v109
  %v585 = vunpack.c.h.b16 %v109
  %v586 = vunpack.c.l.b16 %v110
  %v587 = vunpack.c.h.b16 %v110
  %v588 = vunpack.c.l.b16 %v111
  %v589 = vunpack.c.h.b16 %v111
  %v590 = vunpack.c.l.b16 %v112
  %v591 = vunpack.c.h.b16 %v112
  %v592 = vunpack.c.l.b16 %v113
  %v593 = vunpack.c.h.b16 %v113
  %v594 = vunpack.c.l.b16 %v114
  %v595 = vunpack.c.h.b16 %v114
  %v596 = vunpack.c.l.b16 %v115
  %v597 = vunpack.c.h.b16 %v115
  %v598 = vunpack.c.l.b16 %v116
  %v599 = vunpack.c.h.b16 %v116
  %v600 = vunpack.c.l.b16 %v117
  %v601 = vunpack.c.h.b16 %v117
  %v602 = vunpack.c.l.b16 %v118
  %v603 = vunpack.c.h.b16 %v118
  %v604 = vunpack.c.l.b16 %v119
  %v605 = vunpack.c.h.b16 %v119
  %v606 = vunpack.c.l.b16 %v120
  %v607 = vunpack.c.h.b16 %v120
  %v608 = vunpack.c.l.b16 %v121
  %v609 = vunpack.c.h.b16 %v121
  %v610 = vunpack.c.l.b16 %v122
  %v611 = vunpack.c.h.b16 %v122
  %v612 = vunpack.c.l.b16 %v123
  %v613 = vunpack.c.h.b16 %v123
  %v614 = vunpack.c.l.b16 %v124
  %v615 = vunpack.c.h.b16 %v124
  %v616 = vunpack.c.l.b16 %v125
  %v617 = vunpack.c.h.b16 %v125
  %v618 = vunpack.c.l.b16 %v126
  %v619 = vunpack.c.h.b16 %v126
  %v620 = vunpack.c.l.b16 %v127
  %v621 = vunpack.c.h.b16 %v127
  %v622 = vunpack.c.l.b16 %v128
  %v623 = vunpack.c.h.b16 %v128
  %v624 = vunpack.c.l.b16 %v129
  %v625 = vunpack.c.h.b16 %v129
  %v626 = vunpack.c.l.b16 %v130
  %v627 = vunpack.c.h.b16 %v130
  %v628 = vunpack.c.l.b16 %v131
  %v629 = vunpack.c.h.b16 %v131
  %v630 = vunpack.c.l.b16 %v132
  %v631 = vunpack.c.h.b16 %v132
  %v632 = vunpack.c.l.b16 %v133
  %v633 = vunpack.c.h.b16 %v133
  %v634 = vunpack.c.l.b16 %v134
  %v635 = vunpack.c.h.b16 %v134
  %v636 = vunpack.c.l.b16 %v135
  %v637 = vunpack.c.h.b16 %v135
  %v638 = vunpack.c.l.b16 %v136
  %v639 = vunpack.c.h.b16 %v136
  %v640 = vunpack.c.l.b16 %v137
  %v641 = vunpack.c.h.b16 %v137
  %v642 = vunpack.c.l.b16 %v138
  %v643 = vunpack.c.h.b16 %v138
  %v644 = vunpack.c.l.b16 %v139
  %v645 = vunpack.c.h.b16 %v139
  %v646 = vunpack.c.l.b16 %v140
  %v647 = vunpack.c.h.b16 %v140
  %v648 = vunpack.c.l.b16 %v141
  %v649 = vunpack.c.h.b16 %v141
  %v650 = vunpack.c.l.b16 %v142
  %v651 = vunpack.c.h.b16 %v142
  %v652 = vunpack.c.l.b16 %v143
  %v653 = vunpack.c.h.b16 %v143
  %v654 = vunpack.c.l.b16 %v144
  %v655 = vunpack.c.h.b16 %v144
  %v656 = vunpack.c.l.b16 %v145
  %v657 = vunpack.c.h.b16 %v145
  %v658 = vunpack.c.l.b16 %v146
  %v659 = vunpack.c.h.b16 %v146
  %v660 = vunpack.c.l.b16 %v147
  %v661 = vunpack.c.h.b16 %v147
  %v662 = vunpack.c.l.b16 %v148
  %v663 = vunpack.c.h.b16 %v148
  %v664 = vunpack.c.l.b16 %v149
  %v665 = vunpack.c.h.b16 %v149
  %v666 = vunpack.c.l.b16 %v150
  %v667 = vunpack.c.h.b16 %v150
  %v668 = vunpack.c.l.b16 %v151
  %v669 = vunpack.c.h.b16 %v151
  %v670 = vunpack.c.l.b16 %v152
  %v671 = vunpack.c.h.b16 %v152
  %v672 = vunpack.c.l.b16 %v153
  %v673 = vunpack.c.h.b16 %v153
  %v674 = vunpack.c.l.b16 %v154
  %v675 = vunpack.c.h.b16 %v154
  %v676 = vunpack.c.l.b16 %v155
  %v677 = vunpack.c.h.b16 %v155
  %v678 = vunpack.c.l.b16 %v156
  %v679 = vunpack.c.h.b16 %v156
  %v680 = vunpack.c.l.b16 %v157
  %v681 = vunpack.c.h.b16 %v157
  %v682 = vunpack.c.l.b16 %v158
  %v683 = vunpack.c.h.b16 %v158
  %v684 = vunpack.c.l.b16 %v159
  %v685 = vunpack.c.h.b16 %v159
  %v686 = vunpack.c.l.b16 %v160
  %v687 = vunpack.c.h.b16 %v160
  %v688 = vunpack.c.l.b16 %v161
  %v689 = vunpack.c.h.b16 %v161
  %v690 = vunpack.c.l.b16 %v162
  %v691 = vunpack.c.h.b16 %v162
  %v692 = vunpack.c.l.b16 %v163
  %v693 = vunpack.c.h.b16 %v163
  %v694 = vunpack.c.l.b16 %v164
  %v695 = vunpack.c.h.b16 %v164
  %v696 = vunpack.c.l.b16 %v165
  %v697 = vunpack.c.h.b16 %v165
  %v698 = vunpack.c.l.b16 %v166
  %v699 = vunpack.c.h.b16 %v166
  %v700 = vunpack.c.l.b16 %v167
  %v701 = vunpack.c.h.b16 %v167
  %v702 = vunpack.c.l.b16 %v168
  %v703 = vunpack.c.h.b16 %v168
  %v704 = vunpack.c.l.b16 %v169
  %v705 = vunpack.c.h.b16 %v169
  %v706 = vunpack.c.l.b16 %v170
  %v707 = vunpack.c.h.b16 %v170
  %v708 = vunpack.c.l.b16 %v171
  %v709 = vunpack.c.h.b16 %v171
  %v710 = vunpack.c.l.b16 %v172
  %v711 = vunpack.c.h.b16 %v172
  %v712 = vunpack.c.l.b16 %v173
  %v713 = vunpack.c.h.b16 %v173
  %v714 = vunpack.c.l.b16 %v174
  %v715 = vunpack.c.h.b16 %v174
  %v716 = vunpack.c.l.b16 %v175
  %v717 = vunpack.c.h.b16 %v175
  %v718 = vunpack.c.l.b16 %v176
  %v719 = vunpack.c.h.b16 %v176
  %v720 = vunpack.c.l.b16 %v177
  %v721 = vunpack.c.h.b16 %v177
  %v722 = vpack.c.b16 %v470, %v466
  %v723 = vpack.c.b16 %v471, %v467
  %v724 = vpack.c.b16 %v472, %v468
  %v725 = vpack.c.b16 %v473, %v469
  %v726 = vpack.c.b16 %v478, %v474
  %v727 = vpack.c.b16 %v479, %v475
  %v728 = vpack.c.b16 %v480, %v476
  %v729 = vpack.c.b16 %v481, %v477
  %v730 = vpack.c.b16 %v486, %v482
  %v731 = vpack.c.b16 %v487, %v483
  %v732 = vpack.c.b16 %v488, %v484
  %v733 = vpack.c.b16 %v489, %v485
  %v734 = vpack.c.b16 %v494, %v490
  %v735 = vpack.c.b16 %v495, %v491
  %v736 = vpack.c.b16 %v496, %v492
  %v737 = vpack.c.b16 %v497, %v493
  %v738 = vpack.c.b16 %v502, %v498
  %v739 = vpack.c.b16 %v503, %v499
  %v740 = vpack.c.b16 %v504, %v500
  %v741 = vpack.c.b16 %v505, %v501
  %v742 = vpack.c.b16 %v510, %v506
  %v743 = vpack.c.b16 %v511, %v507
  %v744 = vpack.c.b16 %v512, %v508
  %v745 = vpack.c.b16 %v513, %v509
  %v746 = vpack.c.b16 %v518, %v514
  %v747 = vpack.c.b16 %v519, %v515
  %v748 = vpack.c.b16 %v520, %v516
  %v749 = vpack.c.b16 %v521, %v517
  %v750 = vpack.c.b16 %v526, %v522
  %v751 = vpack.c.b16 %v527, %v523
  %v752 = vpack.c.b16 %v528, %v524
  %v753 = vpack.c.b16 %v529, %v525
  %v754 = vpack.c.b16 %v534, %v530
  %v755 = vpack.c.b16 %v535, %v531
  %v756 = vpack.c.b16 %v536, %v532
  %v757 = vpack.c.b16 %v537, %v533
  %v758 = vpack.c.b16 %v542, %v538
  %v759 = vpack.c.b16 %v543, %v539
  %v760 = vpack.c.b16 %v544, %v540
  %v761 = vpack.c.b16 %v545, %v541
  %v762 = vpack.c.b16 %v550, %v546
  %v763 = vpack.c.b16 %v551, %v547
  %v764 = vpack.c.b16 %v552, %v548
  %v765 = vpack.c.b16 %v553, %v549
  %v766 = vpack.c.b16 %v558, %v554
  %v767 = vpack.c.b16 %v559, %v555
  %v768 = vpack.c.b16 %v560, %v556
  %v769 = vpack.c.b16 %v561, %v557
  %v770 = vpack.c.b16 %v566, %v562
  %v771 = vpack.c.b16 %v567, %v563
  %v772 = vpack.c.b16 %v568, %v564
  %v773 = vpack.c.b16 %v569, %v565
  %v774 = vpack.c.b16 %v574, %v570
  %v775 = vpack.c.b16 %v575, %v571
  %v776 = vpack.c.b16 %v576, %v572
  %v777 = vpack.c.b16 %v577, %v573
  %v778 = vpack.c.b16 %v582, %v578
  %v779 = vpack.c.b16 %v583, %v579
  %v780 = vpack.c.b16 %v584, %v580
  %v781 = vpack.c.b16 %v585, %v581
  %v782 = vpack.c.b16 %v590, %v586
  %v783 = vpack.c.b16 %v591, %v587
  %v784 = vpack.c.b16 %v592, %v588
  %v785 = vpack.c.b16 %v593, %v589
  %v786 = vpack.c.b16 %v598, %v594
  %v787 = vpack.c.b16 %v599, %v595
  %v788 = vpack.c.b16 %v600, %v596
  %v789 = vpack.c.b16 %v601, %v597
  %v790 = vpack.c.b16 %v606, %v602
  %v791 = vpack.c.b16 %v607, %v603
  %v792 = vpack.c.b16 %v608, %v604
  %v793 = vpack.c.b16 %v609, %v605
  %v794 = vpack.c.b16 %v614, %v610
  %v795 = vpack.c.b16 %v615, %v611
  %v796 = vpack.c.b16 %v616, %v612
  %v797 = vpack.c.b16 %v617, %v613
  %v798 = vpack.c.b16 %v622, %v618
  %v799 = vpack.c.b16 %v623, %v619
  %v800 = vpack.c.b16 %v624, %v620
  %v801 = vpack.c.b16 %v625, %v621
  %v802 = vpack.c.b16 %v630, %v626
  %v803 = vpack.c.b16 %v631, %v627
  %v804 = vpack.c.b16 %v632, %v628
  %v805 = vpack.c.b16 %v633, %v629
  %v806 = vpack.c.b16 %v638, %v634
  %v807 = vpack.c.b16 %v639, %v635
  %v808 = vpack.c.b16 %v640, %v636
  %v809 = vpack.c.b16 %v641, %v637
  %v810 = vpack.c.b16 %v646, %v642
  %v811 = vpack.c.b16 %v647, %v643
  %v812 = vpack.c.b16 %v648, %v644
  %v813 = vpack.c.b16 %v649, %v645
  %v814 = vpack.c.b16 %v654, %v650
  %v815 = vpack.c.b16 %v655, %v651
  %v816 = vpack.c.b16 %v656, %v652
  %v817 = vpack.c.b16 %v657, %v653
  %v818 = vpack.c.b16 %v662, %v658
  %v819 = vpack.c.b16 %v663, %v659
  %v820 = vpack.c.b16 %v664, %v660
  %v821 = vpack.c.b16 %v665, %v661
  %v822 = vpack.c.b16 %v670, %v666
  %v823 = vpack.c.b16 %v671, %v667
  %v824 = vpack.c.b16 %v672, %v668
  %v825 = vpack.c.b16 %v673, %v669
  %v826 = vpack.c.b16 %v678, %v674
  %v827 = vpack.c.b16 %v679, %v675
  %v828 = vpack.c.b16 %v680, %v676
  %v829 = vpack.c.b16 %v681, %v677
  %v830 = vpack.c.b16 %v686, %v682
  %v831 = vpack.c.b16 %v687, %v683
  %v832 = vpack.c.b16 %v688, %v684
  %v833 = vpack.c.b16 %v689, %v685
  %v834 = vpack.c.b16 %v694, %v690
  %v835 = vpack.c.b16 %v695, %v691
  %v836 = vpack.c.b16 %v696, %v692
  %v837 = vpack.c.b16 %v697, %v693
  %v838 = vpack.c.b16 %v702, %v698
  %v839 = vpack.c.b16 %v703, %v699
  %v840 = vpack.c.b16 %v704, %v700
  %v841 = vpack.c.b16 %v705, %v701
  %v842 = vpack.c.b16 %v710, %v706
  %v843 = vpack.c.b16 %v711, %v707
  %v844 = vpack.c.b16 %v712, %v708
  %v845 = vpack.c.b16 %v713, %v709
  %v846 = vpack.c.b16 %v718, %v714
  %v847 = vpack.c.b16 %v719, %v715
  %v848 = vpack.c.b16 %v720, %v716
  %v849 = vpack.c.b16 %v721, %v717
  %978 = vmatprep.subr.bf16.mxu0 %v723
  %979 = vmatpush1.bf16.msra.mxu0 %v722
  %980 = vmatprep.subr.bf16.mxu0 %v727
  %981 = vmatpush1.bf16.msra.mxu0 %v726
  %982 = vmatprep.subr.bf16.mxu0 %v731
  %983 = vmatpush1.bf16.msra.mxu0 %v730
  %984 = vmatprep.subr.bf16.mxu0 %v735
  %985 = vmatpush1.bf16.msra.mxu0 %v734
  %986 = vmatprep.subr.bf16.mxu0 %v739
  %987 = vmatpush1.bf16.msra.mxu0 %v738
  %988 = vmatprep.subr.bf16.mxu0 %v743
  %989 = vmatpush1.bf16.msra.mxu0 %v742
  %990 = vmatprep.subr.bf16.mxu0 %v747
  %991 = vmatpush1.bf16.msra.mxu0 %v746
  %992 = vmatprep.subr.bf16.mxu0 %v751
  %993 = vmatpush1.bf16.msra.mxu0 %v750
  %994 = vmatprep.subr.bf16.mxu0 %v755
  %995 = vmatpush1.bf16.msra.mxu0 %v754
  %996 = vmatprep.subr.bf16.mxu0 %v759
  %997 = vmatpush1.bf16.msra.mxu0 %v758
  %998 = vmatprep.subr.bf16.mxu0 %v763
  %999 = vmatpush1.bf16.msra.mxu0 %v762
  %1000 = vmatprep.subr.bf16.mxu0 %v767
  %1001 = vmatpush1.bf16.msra.mxu0 %v766
  %1002 = vmatprep.subr.bf16.mxu0 %v771
  %1003 = vmatpush1.bf16.msra.mxu0 %v770
  %1004 = vmatprep.subr.bf16.mxu0 %v775
  %1005 = vmatpush1.bf16.msra.mxu0 %v774
  %1006 = vmatprep.subr.bf16.mxu0 %v779
  %1007 = vmatpush1.bf16.msra.mxu0 %v778
  %1008 = vmatprep.subr.bf16.mxu0 %v783
  %1009 = vmatpush1.bf16.msra.mxu0 %v782
  %1010 = vmatprep.mubr.bf16.mxu0 %v275
  %1011 = vmatmul.mubr.bf16.gmra.mrb[0].mxu0 %v274
  %v1012 = vpop.f32.mrb[0].mxu0
  %v1013 = vadd.f32 0.0, %v1012
  %v1014 = vpop.f32.mrb[0].mxu0
  %v1015 = vadd.f32 0.0, %v1014
  %v1016 = vpop.f32.mrb[0].mxu0
  %v1017 = vadd.f32 0.0, %v1016
  %v1018 = vpop.f32.mrb[0].mxu0
  %v1019 = vadd.f32 0.0, %v1018
  %1020 = vmatprep.mubr.bf16.mxu0 %v279
  %1021 = vmatmul.mubr.bf16.gmra.mrb[0].mxu0 %v278
  %v1022 = vpop.f32.mrb[0].mxu0
  %v1023 = vadd.f32 0.0, %v1022
  %v1024 = vpop.f32.mrb[0].mxu0
  %v1025 = vadd.f32 0.0, %v1024
  %v1026 = vpop.f32.mrb[0].mxu0
  %v1027 = vadd.f32 0.0, %v1026
  %v1028 = vpop.f32.mrb[0].mxu0
  %v1029 = vadd.f32 0.0, %v1028
  %1030 = vmatprep.mubr.bf16.mxu0 %v283
  %1031 = vmatmul.mubr.bf16.gmra.mrb[0].mxu0 %v282
  %v1032 = vpop.f32.mrb[0].mxu0
  %v1033 = vadd.f32 0.0, %v1032
  %v1034 = vpop.f32.mrb[0].mxu0
  %v1035 = vadd.f32 0.0, %v1034
  %v1036 = vpop.f32.mrb[0].mxu0
  %v1037 = vadd.f32 0.0, %v1036
  %v1038 = vpop.f32.mrb[0].mxu0
  %v1039 = vadd.f32 0.0, %v1038
  %1040 = vmatprep.mubr.bf16.mxu0 %v287
  %1041 = vmatmul.mubr.bf16.gmra.mrb[0].mxu0 %v286
  %v1042 = vpop.f32.mrb[0].mxu0
  %v1043 = vadd.f32 0.0, %v1042
  %v1044 = vpop.f32.mrb[0].mxu0
  %v1045 = vadd.f32 0.0, %v1044
  %v1046 = vpop.f32.mrb[0].mxu0
  %v1047 = vadd.f32 0.0, %v1046
  %v1048 = vpop.f32.mrb[0].mxu0
  %v1049 = vadd.f32 0.0, %v1048
  %1050 = vmatprep.mubr.bf16.mxu0 %v291
  %1051 = vmatmul.mubr.bf16.gmra.mrb[0].mxu0 %v290
  %v1052 = vpop.f32.mrb[0].mxu0
  %v1053 = vadd.f32 0.0, %v1052
  %v1054 = vpop.f32.mrb[0].mxu0
  %v1055 = vadd.f32 0.0, %v1054
  %v1056 = vpop.f32.mrb[0].mxu0
  %v1057 = vadd.f32 0.0, %v1056
  %v1058 = vpop.f32.mrb[0].mxu0
  %v1059 = vadd.f32 0.0, %v1058
  %1060 = vmatprep.mubr.bf16.mxu0 %v295
  %1061 = vmatmul.mubr.bf16.gmra.mrb[0].mxu0 %v294
  %v1062 = vpop.f32.mrb[0].mxu0
  %v1063 = vadd.f32 0.0, %v1062
  %v1064 = vpop.f32.mrb[0].mxu0
  %v1065 = vadd.f32 0.0, %v1064
  %v1066 = vpop.f32.mrb[0].mxu0
  %v1067 = vadd.f32 0.0, %v1066
  %v1068 = vpop.f32.mrb[0].mxu0
  %v1069 = vadd.f32 0.0, %v1068
  %1070 = vmatprep.mubr.bf16.mxu0 %v299
  %1071 = vmatmul.mubr.bf16.gmra.mrb[0].mxu0 %v298
  %v1072 = vpop.f32.mrb[0].mxu0
  %v1073 = vadd.f32 0.0, %v1072
  %v1074 = vpop.f32.mrb[0].mxu0
  %v1075 = vadd.f32 0.0, %v1074
  %v1076 = vpop.f32.mrb[0].mxu0
  %v1077 = vadd.f32 0.0, %v1076
  %v1078 = vpop.f32.mrb[0].mxu0
  %v1079 = vadd.f32 0.0, %v1078
  %1080 = vmatprep.mubr.bf16.mxu0 %v303
  %1081 = vmatmul.mubr.bf16.gmra.mrb[0].mxu0 %v302
  %v1082 = vpop.f32.mrb[0].mxu0
  %v1083 = vadd.f32 0.0, %v1082
  %v1084 = vpop.f32.mrb[0].mxu0
  %v1085 = vadd.f32 0.0, %v1084
  %v1086 = vpop.f32.mrb[0].mxu0
  %v1087 = vadd.f32 0.0, %v1086
  %v1088 = vpop.f32.mrb[0].mxu0
  %v1089 = vadd.f32 0.0, %v1088
  %1090 = vdwg.mxu0
  %1091 = vmatprep.subr.bf16.mxu0 %v787
  %1092 = vmatpush1.bf16.msra.mxu0 %v786
  %1093 = vmatprep.subr.bf16.mxu0 %v791
  %1094 = vmatpush1.bf16.msra.mxu0 %v790
  %1095 = vmatprep.subr.bf16.mxu0 %v795
  %1096 = vmatpush1.bf16.msra.mxu0 %v794
  %1097 = vmatprep.subr.bf16.mxu0 %v799
  %1098 = vmatpush1.bf16.msra.mxu0 %v798
  %1099 = vmatprep.subr.bf16.mxu0 %v803
  %1100 = vmatpush1.bf16.msra.mxu0 %v802
  %1101 = vmatprep.subr.bf16.mxu0 %v807
  %1102 = vmatpush1.bf16.msra.mxu0 %v806
  %1103 = vmatprep.subr.bf16.mxu0 %v811
  %1104 = vmatpush1.bf16.msra.mxu0 %v810
  %1105 = vmatprep.subr.bf16.mxu0 %v815
  %1106 = vmatpush1.bf16.msra.mxu0 %v814
  %1107 = vmatprep.subr.bf16.mxu0 %v819
  %1108 = vmatpush1.bf16.msra.mxu0 %v818
  %1109 = vmatprep.subr.bf16.mxu0 %v823
  %1110 = vmatpush1.bf16.msra.mxu0 %v822
  %1111 = vmatprep.subr.bf16.mxu0 %v827
  %1112 = vmatpush1.bf16.msra.mxu0 %v826
  %1113 = vmatprep.subr.bf16.mxu0 %v831
  %1114 = vmatpush1.bf16.msra.mxu0 %v830
  %1115 = vmatprep.subr.bf16.mxu0 %v835
  %1116 = vmatpush1.bf16.msra.mxu0 %v834
  %1117 = vmatprep.subr.bf16.mxu0 %v839
  %1118 = vmatpush1.bf16.msra.mxu0 %v838
  %1119 = vmatprep.subr.bf16.mxu0 %v843
  %1120 = vmatpush1.bf16.msra.mxu0 %v842
  %1121 = vmatprep.subr.bf16.mxu0 %v847
  %1122 = vmatpush1.bf16.msra.mxu0 %v846
  %1123 = vmatprep.mubr.bf16.mxu0 %v277
  %1124 = vmatmul.mubr.bf16.gmra.mrb[0].mxu0 %v276
  %v1125 = vpop.f32.mrb[0].mxu0
  %v1126 = vadd.f32 %v1013, %v1125
  %v1127 = vpop.f32.mrb[0].mxu0
  %v1128 = vadd.f32 %v1015, %v1127
  %v1129 = vpop.f32.mrb[0].mxu0
  %v1130 = vadd.f32 %v1017, %v1129
  %v1131 = vpop.f32.mrb[0].mxu0
  %v1132 = vadd.f32 %v1019, %v1131
  %1133 = vmatprep.mubr.bf16.mxu0 %v281
  %1134 = vmatmul.mubr.bf16.gmra.mrb[0].mxu0 %v280
  %v1135 = vpop.f32.mrb[0].mxu0
  %v1136 = vadd.f32 %v1023, %v1135
  %v1137 = vpop.f32.mrb[0].mxu0
  %v1138 = vadd.f32 %v1025, %v1137
  %v1139 = vpop.f32.mrb[0].mxu0
  %v1140 = vadd.f32 %v1027, %v1139
  %v1141 = vpop.f32.mrb[0].mxu0
  %v1142 = vadd.f32 %v1029, %v1141
  %1143 = vmatprep.mubr.bf16.mxu0 %v285
  %1144 = vmatmul.mubr.bf16.gmra.mrb[0].mxu0 %v284
  %v1145 = vpop.f32.mrb[0].mxu0
  %v1146 = vadd.f32 %v1033, %v1145
  %v1147 = vpop.f32.mrb[0].mxu0
  %v1148 = vadd.f32 %v1035, %v1147
  %v1149 = vpop.f32.mrb[0].mxu0
  %v1150 = vadd.f32 %v1037, %v1149
  %v1151 = vpop.f32.mrb[0].mxu0
  %v1152 = vadd.f32 %v1039, %v1151
  %1153 = vmatprep.mubr.bf16.mxu0 %v289
  %1154 = vmatmul.mubr.bf16.gmra.mrb[0].mxu0 %v288
  %v1155 = vpop.f32.mrb[0].mxu0
  %v1156 = vadd.f32 %v1043, %v1155
  %v1157 = vpop.f32.mrb[0].mxu0
  %v1158 = vadd.f32 %v1045, %v1157
  %v1159 = vpop.f32.mrb[0].mxu0
  %v1160 = vadd.f32 %v1047, %v1159
  %v1161 = vpop.f32.mrb[0].mxu0
  %v1162 = vadd.f32 %v1049, %v1161
  %1163 = vmatprep.mubr.bf16.mxu0 %v293
  %1164 = vmatmul.mubr.bf16.gmra.mrb[0].mxu0 %v292
  %v1165 = vpop.f32.mrb[0].mxu0
  %v1166 = vadd.f32 %v1053, %v1165
  %v1167 = vpop.f32.mrb[0].mxu0
  %v1168 = vadd.f32 %v1055, %v1167
  %v1169 = vpop.f32.mrb[0].mxu0
  %v1170 = vadd.f32 %v1057, %v1169
  %v1171 = vpop.f32.mrb[0].mxu0
  %v1172 = vadd.f32 %v1059, %v1171
  %1173 = vmatprep.mubr.bf16.mxu0 %v297
  %1174 = vmatmul.mubr.bf16.gmra.mrb[0].mxu0 %v296
  %v1175 = vpop.f32.mrb[0].mxu0
  %v1176 = vadd.f32 %v1063, %v1175
  %v1177 = vpop.f32.mrb[0].mxu0
  %v1178 = vadd.f32 %v1065, %v1177
  %v1179 = vpop.f32.mrb[0].mxu0
  %v1180 = vadd.f32 %v1067, %v1179
  %v1181 = vpop.f32.mrb[0].mxu0
  %v1182 = vadd.f32 %v1069, %v1181
  %1183 = vmatprep.mubr.bf16.mxu0 %v301
  %1184 = vmatmul.mubr.bf16.gmra.mrb[0].mxu0 %v300
  %v1185 = vpop.f32.mrb[0].mxu0
  %v1186 = vadd.f32 %v1073, %v1185
  %v1187 = vpop.f32.mrb[0].mxu0
  %v1188 = vadd.f32 %v1075, %v1187
  %v1189 = vpop.f32.mrb[0].mxu0
  %v1190 = vadd.f32 %v1077, %v1189
  %v1191 = vpop.f32.mrb[0].mxu0
  %v1192 = vadd.f32 %v1079, %v1191
  %1193 = vmatprep.mubr.bf16.mxu0 %v305
  %1194 = vmatmul.mubr.bf16.gmra.mrb[0].mxu0 %v304
  %v1195 = vpop.f32.mrb[0].mxu0
  %v1196 = vadd.f32 %v1083, %v1195
  %v1197 = vpop.f32.mrb[0].mxu0
  %v1198 = vadd.f32 %v1085, %v1197
  %v1199 = vpop.f32.mrb[0].mxu0
  %v1200 = vadd.f32 %v1087, %v1199
  %v1201 = vpop.f32.mrb[0].mxu0
  %v1202 = vadd.f32 %v1089, %v1201
  %1203 = vdwg.mxu0
  %1204 = vmatprep.subr.bf16.mxu0 %v725
  %1205 = vmatpush1.bf16.msra.mxu0 %v724
  %1206 = vmatprep.subr.bf16.mxu0 %v729
  %1207 = vmatpush1.bf16.msra.mxu0 %v728
  %1208 = vmatprep.subr.bf16.mxu0 %v733
  %1209 = vmatpush1.bf16.msra.mxu0 %v732
  %1210 = vmatprep.subr.bf16.mxu0 %v737
  %1211 = vmatpush1.bf16.msra.mxu0 %v736
  %1212 = vmatprep.subr.bf16.mxu0 %v741
  %1213 = vmatpush1.bf16.msra.mxu0 %v740
  %1214 = vmatprep.subr.bf16.mxu0 %v745
  %1215 = vmatpush1.bf16.msra.mxu0 %v744
  %1216 = vmatprep.subr.bf16.mxu0 %v749
  %1217 = vmatpush1.bf16.msra.mxu0 %v748
  %1218 = vmatprep.subr.bf16.mxu0 %v753
  %1219 = vmatpush1.bf16.msra.mxu0 %v752
  %1220 = vmatprep.subr.bf16.mxu0 %v757
  %1221 = vmatpush1.bf16.msra.mxu0 %v756
  %1222 = vmatprep.subr.bf16.mxu0 %v761
  %1223 = vmatpush1.bf16.msra.mxu0 %v760
  %1224 = vmatprep.subr.bf16.mxu0 %v765
  %1225 = vmatpush1.bf16.msra.mxu0 %v764
  %1226 = vmatprep.subr.bf16.mxu0 %v769
  %1227 = vmatpush1.bf16.msra.mxu0 %v768
  %1228 = vmatprep.subr.bf16.mxu0 %v773
  %1229 = vmatpush1.bf16.msra.mxu0 %v772
  %1230 = vmatprep.subr.bf16.mxu0 %v777
  %1231 = vmatpush1.bf16.msra.mxu0 %v776
  %1232 = vmatprep.subr.bf16.mxu0 %v781
  %1233 = vmatpush1.bf16.msra.mxu0 %v780
  %1234 = vmatprep.subr.bf16.mxu0 %v785
  %1235 = vmatpush1.bf16.msra.mxu0 %v784
  %1236 = vmatprep.mubr.bf16.mxu0 %v275
  %1237 = vmatmul.mubr.bf16.gmra.mrb[0].mxu0 %v274
  %v1238 = vpop.f32.mrb[0].mxu0
  %v1239 = vadd.f32 0.0, %v1238
  %v1240 = vpop.f32.mrb[0].mxu0
  %v1241 = vadd.f32 0.0, %v1240
  %v1242 = vpop.f32.mrb[0].mxu0
  %v1243 = vadd.f32 0.0, %v1242
  %v1244 = vpop.f32.mrb[0].mxu0
  %v1245 = vadd.f32 0.0, %v1244
  %1246 = vmatprep.mubr.bf16.mxu0 %v279
  %1247 = vmatmul.mubr.bf16.gmra.mrb[0].mxu0 %v278
  %v1248 = vpop.f32.mrb[0].mxu0
  %v1249 = vadd.f32 0.0, %v1248
  %v1250 = vpop.f32.mrb[0].mxu0
  %v1251 = vadd.f32 0.0, %v1250
  %v1252 = vpop.f32.mrb[0].mxu0
  %v1253 = vadd.f32 0.0, %v1252
  %v1254 = vpop.f32.mrb[0].mxu0
  %v1255 = vadd.f32 0.0, %v1254
  %1256 = vmatprep.mubr.bf16.mxu0 %v283
  %1257 = vmatmul.mubr.bf16.gmra.mrb[0].mxu0 %v282
  %v1258 = vpop.f32.mrb[0].mxu0
  %v1259 = vadd.f32 0.0, %v1258
  %v1260 = vpop.f32.mrb[0].mxu0
  %v1261 = vadd.f32 0.0, %v1260
  %v1262 = vpop.f32.mrb[0].mxu0
  %v1263 = vadd.f32 0.0, %v1262
  %v1264 = vpop.f32.mrb[0].mxu0
  %v1265 = vadd.f32 0.0, %v1264
  %1266 = vmatprep.mubr.bf16.mxu0 %v287
  %1267 = vmatmul.mubr.bf16.gmra.mrb[0].mxu0 %v286
  %v1268 = vpop.f32.mrb[0].mxu0
  %v1269 = vadd.f32 0.0, %v1268
  %v1270 = vpop.f32.mrb[0].mxu0
  %v1271 = vadd.f32 0.0, %v1270
  %v1272 = vpop.f32.mrb[0].mxu0
  %v1273 = vadd.f32 0.0, %v1272
  %v1274 = vpop.f32.mrb[0].mxu0
  %v1275 = vadd.f32 0.0, %v1274
  %1276 = vmatprep.mubr.bf16.mxu0 %v291
  %1277 = vmatmul.mubr.bf16.gmra.mrb[0].mxu0 %v290
  %v1278 = vpop.f32.mrb[0].mxu0
  %v1279 = vadd.f32 0.0, %v1278
  %v1280 = vpop.f32.mrb[0].mxu0
  %v1281 = vadd.f32 0.0, %v1280
  %v1282 = vpop.f32.mrb[0].mxu0
  %v1283 = vadd.f32 0.0, %v1282
  %v1284 = vpop.f32.mrb[0].mxu0
  %v1285 = vadd.f32 0.0, %v1284
  %1286 = vmatprep.mubr.bf16.mxu0 %v295
  %1287 = vmatmul.mubr.bf16.gmra.mrb[0].mxu0 %v294
  %v1288 = vpop.f32.mrb[0].mxu0
  %v1289 = vadd.f32 0.0, %v1288
  %v1290 = vpop.f32.mrb[0].mxu0
  %v1291 = vadd.f32 0.0, %v1290
  %v1292 = vpop.f32.mrb[0].mxu0
  %v1293 = vadd.f32 0.0, %v1292
  %v1294 = vpop.f32.mrb[0].mxu0
  %v1295 = vadd.f32 0.0, %v1294
  %1296 = vmatprep.mubr.bf16.mxu0 %v299
  %1297 = vmatmul.mubr.bf16.gmra.mrb[0].mxu0 %v298
  %v1298 = vpop.f32.mrb[0].mxu0
  %v1299 = vadd.f32 0.0, %v1298
  %v1300 = vpop.f32.mrb[0].mxu0
  %v1301 = vadd.f32 0.0, %v1300
  %v1302 = vpop.f32.mrb[0].mxu0
  %v1303 = vadd.f32 0.0, %v1302
  %v1304 = vpop.f32.mrb[0].mxu0
  %v1305 = vadd.f32 0.0, %v1304
  %1306 = vmatprep.mubr.bf16.mxu0 %v303
  %1307 = vmatmul.mubr.bf16.gmra.mrb[0].mxu0 %v302
  %v1308 = vpop.f32.mrb[0].mxu0
  %v1309 = vadd.f32 0.0, %v1308
  %v1310 = vpop.f32.mrb[0].mxu0
  %v1311 = vadd.f32 0.0, %v1310
  %v1312 = vpop.f32.mrb[0].mxu0
  %v1313 = vadd.f32 0.0, %v1312
  %v1314 = vpop.f32.mrb[0].mxu0
  %v1315 = vadd.f32 0.0, %v1314
  %1316 = vdwg.mxu0
  %1317 = vmatprep.subr.bf16.mxu0 %v789
  %1318 = vmatpush1.bf16.msra.mxu0 %v788
  %1319 = vmatprep.subr.bf16.mxu0 %v793
  %1320 = vmatpush1.bf16.msra.mxu0 %v792
  %1321 = vmatprep.subr.bf16.mxu0 %v797
  %1322 = vmatpush1.bf16.msra.mxu0 %v796
  %1323 = vmatprep.subr.bf16.mxu0 %v801
  %1324 = vmatpush1.bf16.msra.mxu0 %v800
  %1325 = vmatprep.subr.bf16.mxu0 %v805
  %1326 = vmatpush1.bf16.msra.mxu0 %v804
  %1327 = vmatprep.subr.bf16.mxu0 %v809
  %1328 = vmatpush1.bf16.msra.mxu0 %v808
  %1329 = vmatprep.subr.bf16.mxu0 %v813
  %1330 = vmatpush1.bf16.msra.mxu0 %v812
  %1331 = vmatprep.subr.bf16.mxu0 %v817
  %1332 = vmatpush1.bf16.msra.mxu0 %v816
  %1333 = vmatprep.subr.bf16.mxu0 %v821
  %1334 = vmatpush1.bf16.msra.mxu0 %v820
  %1335 = vmatprep.subr.bf16.mxu0 %v825
  %1336 = vmatpush1.bf16.msra.mxu0 %v824
  %1337 = vmatprep.subr.bf16.mxu0 %v829
  %1338 = vmatpush1.bf16.msra.mxu0 %v828
  %1339 = vmatprep.subr.bf16.mxu0 %v833
  %1340 = vmatpush1.bf16.msra.mxu0 %v832
  %1341 = vmatprep.subr.bf16.mxu0 %v837
  %1342 = vmatpush1.bf16.msra.mxu0 %v836
  %1343 = vmatprep.subr.bf16.mxu0 %v841
  %1344 = vmatpush1.bf16.msra.mxu0 %v840
  %1345 = vmatprep.subr.bf16.mxu0 %v845
  %1346 = vmatpush1.bf16.msra.mxu0 %v844
  %1347 = vmatprep.subr.bf16.mxu0 %v849
  %1348 = vmatpush1.bf16.msra.mxu0 %v848
  %1349 = vmatprep.mubr.bf16.mxu0 %v277
  %1350 = vmatmul.mubr.bf16.gmra.mrb[0].mxu0 %v276
  %v1351 = vpop.f32.mrb[0].mxu0
  %v1352 = vadd.f32 %v1239, %v1351
  %v1353 = vpop.f32.mrb[0].mxu0
  %v1354 = vadd.f32 %v1241, %v1353
  %v1355 = vpop.f32.mrb[0].mxu0
  %v1356 = vadd.f32 %v1243, %v1355
  %v1357 = vpop.f32.mrb[0].mxu0
  %v1358 = vadd.f32 %v1245, %v1357
  %1359 = vmatprep.mubr.bf16.mxu0 %v281
  %1360 = vmatmul.mubr.bf16.gmra.mrb[0].mxu0 %v280
  %v1361 = vpop.f32.mrb[0].mxu0
  %v1362 = vadd.f32 %v1249, %v1361
  %v1363 = vpop.f32.mrb[0].mxu0
  %v1364 = vadd.f32 %v1251, %v1363
  %v1365 = vpop.f32.mrb[0].mxu0
  %v1366 = vadd.f32 %v1253, %v1365
  %v1367 = vpop.f32.mrb[0].mxu0
  %v1368 = vadd.f32 %v1255, %v1367
  %1369 = vmatprep.mubr.bf16.mxu0 %v285
  %1370 = vmatmul.mubr.bf16.gmra.mrb[0].mxu0 %v284
  %v1371 = vpop.f32.mrb[0].mxu0
  %v1372 = vadd.f32 %v1259, %v1371
  %v1373 = vpop.f32.mrb[0].mxu0
  %v1374 = vadd.f32 %v1261, %v1373
  %v1375 = vpop.f32.mrb[0].mxu0
  %v1376 = vadd.f32 %v1263, %v1375
  %v1377 = vpop.f32.mrb[0].mxu0
  %v1378 = vadd.f32 %v1265, %v1377
  %1379 = vmatprep.mubr.bf16.mxu0 %v289
  %1380 = vmatmul.mubr.bf16.gmra.mrb[0].mxu0 %v288
  %v1381 = vpop.f32.mrb[0].mxu0
  %v1382 = vadd.f32 %v1269, %v1381
  %v1383 = vpop.f32.mrb[0].mxu0
  %v1384 = vadd.f32 %v1271, %v1383
  %v1385 = vpop.f32.mrb[0].mxu0
  %v1386 = vadd.f32 %v1273, %v1385
  %v1387 = vpop.f32.mrb[0].mxu0
  %v1388 = vadd.f32 %v1275, %v1387
  %1389 = vmatprep.mubr.bf16.mxu0 %v293
  %1390 = vmatmul.mubr.bf16.gmra.mrb[0].mxu0 %v292
  %v1391 = vpop.f32.mrb[0].mxu0
  %v1392 = vadd.f32 %v1279, %v1391
  %v1393 = vpop.f32.mrb[0].mxu0
  %v1394 = vadd.f32 %v1281, %v1393
  %v1395 = vpop.f32.mrb[0].mxu0
  %v1396 = vadd.f32 %v1283, %v1395
  %v1397 = vpop.f32.mrb[0].mxu0
  %v1398 = vadd.f32 %v1285, %v1397
  %1399 = vmatprep.mubr.bf16.mxu0 %v297
  %1400 = vmatmul.mubr.bf16.gmra.mrb[0].mxu0 %v296
  %v1401 = vpop.f32.mrb[0].mxu0
  %v1402 = vadd.f32 %v1289, %v1401
  %v1403 = vpop.f32.mrb[0].mxu0
  %v1404 = vadd.f32 %v1291, %v1403
  %v1405 = vpop.f32.mrb[0].mxu0
  %v1406 = vadd.f32 %v1293, %v1405
  %v1407 = vpop.f32.mrb[0].mxu0
  %v1408 = vadd.f32 %v1295, %v1407
  %1409 = vmatprep.mubr.bf16.mxu0 %v301
  %1410 = vmatmul.mubr.bf16.gmra.mrb[0].mxu0 %v300
  %v1411 = vpop.f32.mrb[0].mxu0
  %v1412 = vadd.f32 %v1299, %v1411
  %v1413 = vpop.f32.mrb[0].mxu0
  %v1414 = vadd.f32 %v1301, %v1413
  %v1415 = vpop.f32.mrb[0].mxu0
  %v1416 = vadd.f32 %v1303, %v1415
  %v1417 = vpop.f32.mrb[0].mxu0
  %v1418 = vadd.f32 %v1305, %v1417
  %1419 = vmatprep.mubr.bf16.mxu0 %v305
  %1420 = vmatmul.mubr.bf16.gmra.mrb[0].mxu0 %v304
  %v1421 = vpop.f32.mrb[0].mxu0
  %v1422 = vadd.f32 %v1309, %v1421
  %v1423 = vpop.f32.mrb[0].mxu0
  %v1424 = vadd.f32 %v1311, %v1423
  %v1425 = vpop.f32.mrb[0].mxu0
  %v1426 = vadd.f32 %v1313, %v1425
  %v1427 = vpop.f32.mrb[0].mxu0
  %v1428 = vadd.f32 %v1315, %v1427
  %1429 = vdwg.mxu0
  %v1430 = vmul.f32 %v1126, %v1126
  %v1431 = vmul.f32 %v1128, %v1128
  %v1432 = vmul.f32 %v1130, %v1130
  %v1433 = vmul.f32 %v1132, %v1132
  %v1434 = vmul.f32 %v1136, %v1136
  %v1435 = vmul.f32 %v1138, %v1138
  %v1436 = vmul.f32 %v1140, %v1140
  %v1437 = vmul.f32 %v1142, %v1142
  %v1438 = vmul.f32 %v1146, %v1146
  %v1439 = vmul.f32 %v1148, %v1148
  %v1440 = vmul.f32 %v1150, %v1150
  %v1441 = vmul.f32 %v1152, %v1152
  %v1442 = vmul.f32 %v1156, %v1156
  %v1443 = vmul.f32 %v1158, %v1158
  %v1444 = vmul.f32 %v1160, %v1160
  %v1445 = vmul.f32 %v1162, %v1162
  %v1446 = vmul.f32 %v1166, %v1166
  %v1447 = vmul.f32 %v1168, %v1168
  %v1448 = vmul.f32 %v1170, %v1170
  %v1449 = vmul.f32 %v1172, %v1172
  %v1450 = vmul.f32 %v1176, %v1176
  %v1451 = vmul.f32 %v1178, %v1178
  %v1452 = vmul.f32 %v1180, %v1180
  %v1453 = vmul.f32 %v1182, %v1182
  %v1454 = vmul.f32 %v1186, %v1186
  %v1455 = vmul.f32 %v1188, %v1188
  %v1456 = vmul.f32 %v1190, %v1190
  %v1457 = vmul.f32 %v1192, %v1192
  %v1458 = vmul.f32 %v1196, %v1196
  %v1459 = vmul.f32 %v1198, %v1198
  %v1460 = vmul.f32 %v1200, %v1200
  %v1461 = vmul.f32 %v1202, %v1202
  %v1462 = vmul.f32 %v1352, %v1352
  %v1463 = vmul.f32 %v1354, %v1354
  %v1464 = vmul.f32 %v1356, %v1356
  %v1465 = vmul.f32 %v1358, %v1358
  %v1466 = vmul.f32 %v1362, %v1362
  %v1467 = vmul.f32 %v1364, %v1364
  %v1468 = vmul.f32 %v1366, %v1366
  %v1469 = vmul.f32 %v1368, %v1368
  %v1470 = vmul.f32 %v1372, %v1372
  %v1471 = vmul.f32 %v1374, %v1374
  %v1472 = vmul.f32 %v1376, %v1376
  %v1473 = vmul.f32 %v1378, %v1378
  %v1474 = vmul.f32 %v1382, %v1382
  %v1475 = vmul.f32 %v1384, %v1384
  %v1476 = vmul.f32 %v1386, %v1386
  %v1477 = vmul.f32 %v1388, %v1388
  %v1478 = vmul.f32 %v1392, %v1392
  %v1479 = vmul.f32 %v1394, %v1394
  %v1480 = vmul.f32 %v1396, %v1396
  %v1481 = vmul.f32 %v1398, %v1398
  %v1482 = vmul.f32 %v1402, %v1402
  %v1483 = vmul.f32 %v1404, %v1404
  %v1484 = vmul.f32 %v1406, %v1406
  %v1485 = vmul.f32 %v1408, %v1408
  %v1486 = vmul.f32 %v1412, %v1412
  %v1487 = vmul.f32 %v1414, %v1414
  %v1488 = vmul.f32 %v1416, %v1416
  %v1489 = vmul.f32 %v1418, %v1418
  %v1490 = vmul.f32 %v1422, %v1422
  %v1491 = vmul.f32 %v1424, %v1424
  %v1492 = vmul.f32 %v1426, %v1426
  %v1493 = vmul.f32 %v1428, %v1428
  %v1494 = vadd.f32 %v1430, %v1462
  %v1495 = vadd.f32 %v1431, %v1463
  %v1496 = vadd.f32 %v1432, %v1464
  %v1497 = vadd.f32 %v1433, %v1465
  %v1498 = vadd.f32 %v1434, %v1466
  %v1499 = vadd.f32 %v1435, %v1467
  %v1500 = vadd.f32 %v1436, %v1468
  %v1501 = vadd.f32 %v1437, %v1469
  %v1502 = vadd.f32 %v1438, %v1470
  %v1503 = vadd.f32 %v1439, %v1471
  %v1504 = vadd.f32 %v1440, %v1472
  %v1505 = vadd.f32 %v1441, %v1473
  %v1506 = vadd.f32 %v1442, %v1474
  %v1507 = vadd.f32 %v1443, %v1475
  %v1508 = vadd.f32 %v1444, %v1476
  %v1509 = vadd.f32 %v1445, %v1477
  %v1510 = vadd.f32 %v1446, %v1478
  %v1511 = vadd.f32 %v1447, %v1479
  %v1512 = vadd.f32 %v1448, %v1480
  %v1513 = vadd.f32 %v1449, %v1481
  %v1514 = vadd.f32 %v1450, %v1482
  %v1515 = vadd.f32 %v1451, %v1483
  %v1516 = vadd.f32 %v1452, %v1484
  %v1517 = vadd.f32 %v1453, %v1485
  %v1518 = vadd.f32 %v1454, %v1486
  %v1519 = vadd.f32 %v1455, %v1487
  %v1520 = vadd.f32 %v1456, %v1488
  %v1521 = vadd.f32 %v1457, %v1489
  %v1522 = vadd.f32 %v1458, %v1490
  %v1523 = vadd.f32 %v1459, %v1491
  %v1524 = vadd.f32 %v1460, %v1492
  %v1525 = vadd.f32 %v1461, %v1493
  %v1526 = vpack.c.bf16 %v1496, %v1494
  %v1527 = vpack.c.bf16 %v1497, %v1495
  %v1528 = vpack.c.bf16 %v1500, %v1498
  %v1529 = vpack.c.bf16 %v1501, %v1499
  %v1530 = vpack.c.bf16 %v1504, %v1502
  %v1531 = vpack.c.bf16 %v1505, %v1503
  %v1532 = vpack.c.bf16 %v1508, %v1506
  %v1533 = vpack.c.bf16 %v1509, %v1507
  %v1534 = vpack.c.bf16 %v1512, %v1510
  %v1535 = vpack.c.bf16 %v1513, %v1511
  %v1536 = vpack.c.bf16 %v1516, %v1514
  %v1537 = vpack.c.bf16 %v1517, %v1515
  %v1538 = vpack.c.bf16 %v1520, %v1518
  %v1539 = vpack.c.bf16 %v1521, %v1519
  %v1540 = vpack.c.bf16 %v1524, %v1522
  %v1541 = vpack.c.bf16 %v1525, %v1523
  %v1542 = vld [vmem:[%s2] sm:$0xf]
  %v1543 = vld [vmem:[%s2 + $0x4] sm:$0xf]
  %v1544 = vld [vmem:[%s2 + $0x8] sm:$0xf]
  %v1545 = vld [vmem:[%s2 + $0xc] sm:$0xf]
  %v1546 = vld [vmem:[%s2 + $0x10] sm:$0xf]
  %v1547 = vld [vmem:[%s2 + $0x14] sm:$0xf]
  %v1548 = vld [vmem:[%s2 + $0x18] sm:$0xf]
  %v1549 = vld [vmem:[%s2 + $0x1c] sm:$0xf]
  %v1550 = vld [vmem:[%s2 + $0x20] sm:$0xf]
  %v1551 = vld [vmem:[%s2 + $0x24] sm:$0xf]
  %v1552 = vld [vmem:[%s2 + $0x28] sm:$0xf]
  %v1553 = vld [vmem:[%s2 + $0x2c] sm:$0xf]
  %v1554 = vld [vmem:[%s2 + $0x30] sm:$0xf]
  %v1555 = vld [vmem:[%s2 + $0x34] sm:$0xf]
  %v1556 = vld [vmem:[%s2 + $0x38] sm:$0xf]
  %v1557 = vld [vmem:[%s2 + $0x3c] sm:$0xf]
  %v1558 = vld [vmem:[%s2 + $0x40] sm:$0xf]
  %v1559 = vld [vmem:[%s2 + $0x44] sm:$0xf]
  %v1560 = vld [vmem:[%s2 + $0x48] sm:$0xf]
  %v1561 = vld [vmem:[%s2 + $0x4c] sm:$0xf]
  %v1562 = vld [vmem:[%s2 + $0x50] sm:$0xf]
  %v1563 = vld [vmem:[%s2 + $0x54] sm:$0xf]
  %v1564 = vld [vmem:[%s2 + $0x58] sm:$0xf]
  %v1565 = vld [vmem:[%s2 + $0x5c] sm:$0xf]
  %v1566 = vld [vmem:[%s2 + $0x60] sm:$0xf]
  %v1567 = vld [vmem:[%s2 + $0x64] sm:$0xf]
  %v1568 = vld [vmem:[%s2 + $0x68] sm:$0xf]
  %v1569 = vld [vmem:[%s2 + $0x6c] sm:$0xf]
  %v1570 = vld [vmem:[%s2 + $0x70] sm:$0xf]
  %v1571 = vld [vmem:[%s2 + $0x74] sm:$0xf]
  %v1572 = vld [vmem:[%s2 + $0x78] sm:$0xf]
  %v1573 = vld [vmem:[%s2 + $0x7c] sm:$0xf]
  %v1606 = vunpack.c.l.b16 %v1542
  %v1607 = vunpack.c.l.b16 %v1543
  %v1608 = vunpack.c.l.b16 %v1544
  %v1609 = vunpack.c.l.b16 %v1545
  %v1610 = vunpack.c.l.b16 %v1546
  %v1611 = vunpack.c.l.b16 %v1547
  %v1612 = vunpack.c.l.b16 %v1548
  %v1613 = vunpack.c.l.b16 %v1549
  %v1614 = vunpack.c.l.b16 %v1550
  %v1615 = vunpack.c.l.b16 %v1551
  %v1616 = vunpack.c.l.b16 %v1552
  %v1617 = vunpack.c.l.b16 %v1553
  %v1618 = vunpack.c.l.b16 %v1554
  %v1619 = vunpack.c.l.b16 %v1555
  %v1620 = vunpack.c.l.b16 %v1556
  %v1621 = vunpack.c.l.b16 %v1557
  %v1622 = vunpack.c.l.b16 %v1558
  %v1623 = vunpack.c.l.b16 %v1559
  %v1624 = vunpack.c.l.b16 %v1560
  %v1625 = vunpack.c.l.b16 %v1561
  %v1626 = vunpack.c.l.b16 %v1562
  %v1627 = vunpack.c.l.b16 %v1563
  %v1628 = vunpack.c.l.b16 %v1564
  %v1629 = vunpack.c.l.b16 %v1565
  %v1630 = vunpack.c.l.b16 %v1566
  %v1631 = vunpack.c.l.b16 %v1567
  %v1632 = vunpack.c.l.b16 %v1568
  %v1633 = vunpack.c.l.b16 %v1569
  %v1634 = vunpack.c.l.b16 %v1570
  %v1635 = vunpack.c.l.b16 %v1571
  %v1636 = vunpack.c.l.b16 %v1572
  %v1637 = vunpack.c.l.b16 %v1573
  %v1638 = vpack.c.b16 %v1607, %v1606
  %v1639 = vpack.c.b16 %v1609, %v1608
  %v1640 = vpack.c.b16 %v1611, %v1610
  %v1641 = vpack.c.b16 %v1613, %v1612
  %v1642 = vpack.c.b16 %v1615, %v1614
  %v1643 = vpack.c.b16 %v1617, %v1616
  %v1644 = vpack.c.b16 %v1619, %v1618
  %v1645 = vpack.c.b16 %v1621, %v1620
  %v1646 = vpack.c.b16 %v1623, %v1622
  %v1647 = vpack.c.b16 %v1625, %v1624
  %v1648 = vpack.c.b16 %v1627, %v1626
  %v1649 = vpack.c.b16 %v1629, %v1628
  %v1650 = vpack.c.b16 %v1631, %v1630
  %v1651 = vpack.c.b16 %v1633, %v1632
  %v1652 = vpack.c.b16 %v1635, %v1634
  %v1653 = vpack.c.b16 %v1637, %v1636
  %1670 = vmatprep.subr.bf16.mxu0 0
  %1671 = vmatpush1.bf16.msra.mxu0 %v1638
  %1672 = vmatprep.subr.bf16.mxu0 0
  %1673 = vmatpush1.bf16.msra.mxu0 %v1639
  %1674 = vmatprep.subr.bf16.mxu0 0
  %1675 = vmatpush1.bf16.msra.mxu0 %v1640
  %1676 = vmatprep.subr.bf16.mxu0 0
  %1677 = vmatpush1.bf16.msra.mxu0 %v1641
  %1678 = vmatprep.subr.bf16.mxu0 0
  %1679 = vmatpush1.bf16.msra.mxu0 %v1642
  %1680 = vmatprep.subr.bf16.mxu0 0
  %1681 = vmatpush1.bf16.msra.mxu0 %v1643
  %1682 = vmatprep.subr.bf16.mxu0 0
  %1683 = vmatpush1.bf16.msra.mxu0 %v1644
  %1684 = vmatprep.subr.bf16.mxu0 0
  %1685 = vmatpush1.bf16.msra.mxu0 %v1645
  %1686 = vmatprep.subr.bf16.mxu0 0
  %1687 = vmatpush1.bf16.msra.mxu0 %v1646
  %1688 = vmatprep.subr.bf16.mxu0 0
  %1689 = vmatpush1.bf16.msra.mxu0 %v1647
  %1690 = vmatprep.subr.bf16.mxu0 0
  %1691 = vmatpush1.bf16.msra.mxu0 %v1648
  %1692 = vmatprep.subr.bf16.mxu0 0
  %1693 = vmatpush1.bf16.msra.mxu0 %v1649
  %1694 = vmatprep.subr.bf16.mxu0 0
  %1695 = vmatpush1.bf16.msra.mxu0 %v1650
  %1696 = vmatprep.subr.bf16.mxu0 0
  %1697 = vmatpush1.bf16.msra.mxu0 %v1651
  %1698 = vmatprep.subr.bf16.mxu0 0
  %1699 = vmatpush1.bf16.msra.mxu0 %v1652
  %1700 = vmatprep.subr.bf16.mxu0 0
  %1701 = vmatpush1.bf16.msra.mxu0 %v1653
  %1702 = vmatprep.mubr.bf16.mxu0 %v1527
  %1703 = vmatmul.mubr.bf16.gmra.mrb[0].mxu0 %v1526
  %v1704 = vpop.f32.mrb[0].mxu0
  %v1705 = vadd.f32 0.0, %v1704
  %v1706 = vpop.f32.mrb[0].mxu0
  %v1707 = vpop.f32.mrb[0].mxu0
  %v1708 = vadd.f32 0.0, %v1707
  %v1709 = vpop.f32.mrb[0].mxu0
  %1710 = vmatprep.mubr.bf16.mxu0 %v1529
  %1711 = vmatmul.mubr.bf16.gmra.mrb[0].mxu0 %v1528
  %v1712 = vpop.f32.mrb[0].mxu0
  %v1713 = vadd.f32 0.0, %v1712
  %v1714 = vpop.f32.mrb[0].mxu0
  %v1715 = vpop.f32.mrb[0].mxu0
  %v1716 = vadd.f32 0.0, %v1715
  %v1717 = vpop.f32.mrb[0].mxu0
  %1718 = vmatprep.mubr.bf16.mxu0 %v1531
  %1719 = vmatmul.mubr.bf16.gmra.mrb[0].mxu0 %v1530
  %v1720 = vpop.f32.mrb[0].mxu0
  %v1721 = vadd.f32 0.0, %v1720
  %v1722 = vpop.f32.mrb[0].mxu0
  %v1723 = vpop.f32.mrb[0].mxu0
  %v1724 = vadd.f32 0.0, %v1723
  %v1725 = vpop.f32.mrb[0].mxu0
  %1726 = vmatprep.mubr.bf16.mxu0 %v1533
  %1727 = vmatmul.mubr.bf16.gmra.mrb[0].mxu0 %v1532
  %v1728 = vpop.f32.mrb[0].mxu0
  %v1729 = vadd.f32 0.0, %v1728
  %v1730 = vpop.f32.mrb[0].mxu0
  %v1731 = vpop.f32.mrb[0].mxu0
  %v1732 = vadd.f32 0.0, %v1731
  %v1733 = vpop.f32.mrb[0].mxu0
  %1734 = vmatprep.mubr.bf16.mxu0 %v1535
  %1735 = vmatmul.mubr.bf16.gmra.mrb[0].mxu0 %v1534
  %v1736 = vpop.f32.mrb[0].mxu0
  %v1737 = vadd.f32 0.0, %v1736
  %v1738 = vpop.f32.mrb[0].mxu0
  %v1739 = vpop.f32.mrb[0].mxu0
  %v1740 = vadd.f32 0.0, %v1739
  %v1741 = vpop.f32.mrb[0].mxu0
  %1742 = vmatprep.mubr.bf16.mxu0 %v1537
  %1743 = vmatmul.mubr.bf16.gmra.mrb[0].mxu0 %v1536
  %v1744 = vpop.f32.mrb[0].mxu0
  %v1745 = vadd.f32 0.0, %v1744
  %v1746 = vpop.f32.mrb[0].mxu0
  %v1747 = vpop.f32.mrb[0].mxu0
  %v1748 = vadd.f32 0.0, %v1747
  %v1749 = vpop.f32.mrb[0].mxu0
  %1750 = vmatprep.mubr.bf16.mxu0 %v1539
  %1751 = vmatmul.mubr.bf16.gmra.mrb[0].mxu0 %v1538
  %v1752 = vpop.f32.mrb[0].mxu0
  %v1753 = vadd.f32 0.0, %v1752
  %v1754 = vpop.f32.mrb[0].mxu0
  %v1755 = vpop.f32.mrb[0].mxu0
  %v1756 = vadd.f32 0.0, %v1755
  %v1757 = vpop.f32.mrb[0].mxu0
  %1758 = vmatprep.mubr.bf16.mxu0 %v1541
  %1759 = vmatmul.mubr.bf16.gmra.mrb[0].mxu0 %v1540
  %v1760 = vpop.f32.mrb[0].mxu0
  %v1761 = vadd.f32 0.0, %v1760
  %v1762 = vpop.f32.mrb[0].mxu0
  %v1763 = vpop.f32.mrb[0].mxu0
  %v1764 = vadd.f32 0.0, %v1763
  %v1765 = vpop.f32.mrb[0].mxu0
  %1766 = vdwg.mxu0
  %v1767 = vmax.f32 %v1705, 1e-10
  %v1768 = vmax.f32 %v1708, 1e-10
  %v1769 = vmax.f32 %v1713, 1e-10
  %v1770 = vmax.f32 %v1716, 1e-10
  %v1771 = vmax.f32 %v1721, 1e-10
  %v1772 = vmax.f32 %v1724, 1e-10
  %v1773 = vmax.f32 %v1729, 1e-10
  %v1774 = vmax.f32 %v1732, 1e-10
  %v1775 = vmax.f32 %v1737, 1e-10
  %v1776 = vmax.f32 %v1740, 1e-10
  %v1777 = vmax.f32 %v1745, 1e-10
  %v1778 = vmax.f32 %v1748, 1e-10
  %v1779 = vmax.f32 %v1753, 1e-10
  %v1780 = vmax.f32 %v1756, 1e-10
  %v1781 = vmax.f32 %v1761, 1e-10
  %v1782 = vmax.f32 %v1764, 1e-10
  %v1783 = vlog2.pop %v1767
  %v1784 = vmul.f32 %v1783, 0.6931472
  %v1785 = vlog2.pop %v1768
  %v1786 = vmul.f32 %v1785, 0.6931472
  %v1787 = vlog2.pop %v1769
  %v1788 = vmul.f32 %v1787, 0.6931472
  %v1789 = vlog2.pop %v1770
  %v1790 = vmul.f32 %v1789, 0.6931472
  %v1791 = vlog2.pop %v1771
  %v1792 = vmul.f32 %v1791, 0.6931472
  %v1793 = vlog2.pop %v1772
  %v1794 = vmul.f32 %v1793, 0.6931472
  %v1795 = vlog2.pop %v1773
  %v1796 = vmul.f32 %v1795, 0.6931472
  %v1797 = vlog2.pop %v1774
  %v1798 = vmul.f32 %v1797, 0.6931472
  %v1799 = vlog2.pop %v1775
  %v1800 = vmul.f32 %v1799, 0.6931472
  %v1801 = vlog2.pop %v1776
  %v1802 = vmul.f32 %v1801, 0.6931472
  %v1803 = vlog2.pop %v1777
  %v1804 = vmul.f32 %v1803, 0.6931472
  %v1805 = vlog2.pop %v1778
  %v1806 = vmul.f32 %v1805, 0.6931472
  %v1807 = vlog2.pop %v1779
  %v1808 = vmul.f32 %v1807, 0.6931472
  %v1809 = vlog2.pop %v1780
  %v1810 = vmul.f32 %v1809, 0.6931472
  %v1811 = vlog2.pop %v1781
  %v1812 = vmul.f32 %v1811, 0.6931472
  %v1813 = vlog2.pop %v1782
  %v1814 = vmul.f32 %v1813, 0.6931472
  %v1815 = vmul.f32 %v1784, 0.4342945
  %v1816 = vmul.f32 %v1786, 0.4342945
  %v1817 = vmul.f32 %v1788, 0.4342945
  %v1818 = vmul.f32 %v1790, 0.4342945
  %v1819 = vmul.f32 %v1792, 0.4342945
  %v1820 = vmul.f32 %v1794, 0.4342945
  %v1821 = vmul.f32 %v1796, 0.4342945
  %v1822 = vmul.f32 %v1798, 0.4342945
  %v1823 = vmul.f32 %v1800, 0.4342945
  %v1824 = vmul.f32 %v1802, 0.4342945
  %v1825 = vmul.f32 %v1804, 0.4342945
  %v1826 = vmul.f32 %v1806, 0.4342945
  %v1827 = vmul.f32 %v1808, 0.4342945
  %v1828 = vmul.f32 %v1810, 0.4342945
  %v1829 = vmul.f32 %v1812, 0.4342945
  %v1830 = vmul.f32 %v1814, 0.4342945
  %v1831 = vmul.f32 %v1815, 10.0
  %v1832 = vmul.f32 %v1816, 10.0
  %v1833 = vmul.f32 %v1817, 10.0
  %v1834 = vmul.f32 %v1818, 10.0
  %v1835 = vmul.f32 %v1819, 10.0
  %v1836 = vmul.f32 %v1820, 10.0
  %v1837 = vmul.f32 %v1821, 10.0
  %v1838 = vmul.f32 %v1822, 10.0
  %v1839 = vmul.f32 %v1823, 10.0
  %v1840 = vmul.f32 %v1824, 10.0
  %v1841 = vmul.f32 %v1825, 10.0
  %v1842 = vmul.f32 %v1826, 10.0
  %v1843 = vmul.f32 %v1827, 10.0
  %v1844 = vmul.f32 %v1828, 10.0
  %v1845 = vmul.f32 %v1829, 10.0
  %v1846 = vmul.f32 %v1830, 10.0
  %v1847 = vpack.c.bf16 %v1832, %v1831
  %v1848 = vpack.c.bf16 %v1834, %v1833
  %v1849 = vpack.c.bf16 %v1836, %v1835
  %v1850 = vpack.c.bf16 %v1838, %v1837
  %v1851 = vpack.c.bf16 %v1840, %v1839
  %v1852 = vpack.c.bf16 %v1842, %v1841
  %v1853 = vpack.c.bf16 %v1844, %v1843
  %v1854 = vpack.c.bf16 %v1846, %v1845
  %v1855 = vld [vmem:[%s3] sm:$0xf]
  %v1856 = vld [vmem:[%s3 + $0x4] sm:$0xf]
  %v1857 = vld [vmem:[%s3 + $0x8] sm:$0xf]
  %v1858 = vld [vmem:[%s3 + $0xc] sm:$0xf]
  %v1859 = vld [vmem:[%s3 + $0x10] sm:$0xf]
  %v1860 = vld [vmem:[%s3 + $0x14] sm:$0xf]
  %v1861 = vld [vmem:[%s3 + $0x18] sm:$0xf]
  %v1862 = vld [vmem:[%s3 + $0x1c] sm:$0xf]
  %v1863 = vld [vmem:[%s3 + $0x20] sm:$0xf]
  %v1864 = vld [vmem:[%s3 + $0x24] sm:$0xf]
  %v1865 = vld [vmem:[%s3 + $0x28] sm:$0xf]
  %v1866 = vld [vmem:[%s3 + $0x2c] sm:$0xf]
  %v1867 = vld [vmem:[%s3 + $0x30] sm:$0xf]
  %v1868 = vld [vmem:[%s3 + $0x34] sm:$0xf]
  %v1869 = vld [vmem:[%s3 + $0x38] sm:$0xf]
  %v1870 = vld [vmem:[%s3 + $0x3c] sm:$0xf]
  %v1887 = vunpack.c.l.b16 %v1855
  %v1888 = vunpack.c.l.b16 %v1856
  %v1889 = vunpack.c.l.b16 %v1857
  %v1890 = vunpack.c.l.b16 %v1858
  %v1891 = vunpack.c.l.b16 %v1859
  %v1892 = vunpack.c.l.b16 %v1860
  %v1893 = vunpack.c.l.b16 %v1861
  %v1894 = vunpack.c.l.b16 %v1862
  %v1895 = vunpack.c.l.b16 %v1863
  %v1896 = vunpack.c.l.b16 %v1864
  %v1897 = vunpack.c.l.b16 %v1865
  %v1898 = vunpack.c.l.b16 %v1866
  %v1899 = vunpack.c.l.b16 %v1867
  %v1900 = vunpack.c.l.b16 %v1868
  %v1901 = vunpack.c.l.b16 %v1869
  %v1902 = vunpack.c.l.b16 %v1870
  %v1903 = vpack.c.b16 %v1888, %v1887
  %v1904 = vpack.c.b16 %v1890, %v1889
  %v1905 = vpack.c.b16 %v1892, %v1891
  %v1906 = vpack.c.b16 %v1894, %v1893
  %v1907 = vpack.c.b16 %v1896, %v1895
  %v1908 = vpack.c.b16 %v1898, %v1897
  %v1909 = vpack.c.b16 %v1900, %v1899
  %v1910 = vpack.c.b16 %v1902, %v1901
  %1919 = vmatprep.subr.bf16.mxu0 0
  %1920 = vmatpush1.bf16.msra.mxu0 %v1903
  %1921 = vmatprep.subr.bf16.mxu0 0
  %1922 = vmatpush1.bf16.msra.mxu0 %v1904
  %1923 = vmatprep.subr.bf16.mxu0 0
  %1924 = vmatpush1.bf16.msra.mxu0 %v1905
  %1925 = vmatprep.subr.bf16.mxu0 0
  %1926 = vmatpush1.bf16.msra.mxu0 %v1906
  %1927 = vmatprep.subr.bf16.mxu0 0
  %1928 = vmatpush1.bf16.msra.mxu0 %v1907
  %1929 = vmatprep.subr.bf16.mxu0 0
  %1930 = vmatpush1.bf16.msra.mxu0 %v1908
  %1931 = vmatprep.subr.bf16.mxu0 0
  %1932 = vmatpush1.bf16.msra.mxu0 %v1909
  %1933 = vmatprep.subr.bf16.mxu0 0
  %1934 = vmatpush1.bf16.msra.mxu0 %v1910
  %1935 = vmatprep.subr.bf16.mxu0 0
  %1936 = vmatpush1.bf16.msra.mxu0 0
  %1937 = vmatprep.subr.bf16.mxu0 0
  %1938 = vmatpush1.bf16.msra.mxu0 0
  %1939 = vmatprep.subr.bf16.mxu0 0
  %1940 = vmatpush1.bf16.msra.mxu0 0
  %1941 = vmatprep.subr.bf16.mxu0 0
  %1942 = vmatpush1.bf16.msra.mxu0 0
  %1943 = vmatprep.subr.bf16.mxu0 0
  %1944 = vmatpush1.bf16.msra.mxu0 0
  %1945 = vmatprep.subr.bf16.mxu0 0
  %1946 = vmatpush1.bf16.msra.mxu0 0
  %1947 = vmatprep.subr.bf16.mxu0 0
  %1948 = vmatpush1.bf16.msra.mxu0 0
  %1949 = vmatprep.subr.bf16.mxu0 0
  %1950 = vmatpush1.bf16.msra.mxu0 0
  %1951 = vmatprep.mubr.bf16.mxu0 0
  %1952 = vmatmul.mubr.bf16.gmra.mrb[0].mxu0 %v1847
  %v1953 = vpop.f32.mrb[0].mxu0
  %v1954 = vadd.f32 0.0, %v1953
  %v1955 = vpop.f32.mrb[0].mxu0
  %v1956 = vpop.f32.mrb[0].mxu0
  %v1957 = vadd.f32 0.0, %v1956
  %v1958 = vpop.f32.mrb[0].mxu0
  %1959 = vmatprep.mubr.bf16.mxu0 0
  %1960 = vmatmul.mubr.bf16.gmra.mrb[0].mxu0 %v1848
  %v1961 = vpop.f32.mrb[0].mxu0
  %v1962 = vadd.f32 0.0, %v1961
  %v1963 = vpop.f32.mrb[0].mxu0
  %v1964 = vpop.f32.mrb[0].mxu0
  %v1965 = vadd.f32 0.0, %v1964
  %v1966 = vpop.f32.mrb[0].mxu0
  %1967 = vmatprep.mubr.bf16.mxu0 0
  %1968 = vmatmul.mubr.bf16.gmra.mrb[0].mxu0 %v1849
  %v1969 = vpop.f32.mrb[0].mxu0
  %v1970 = vadd.f32 0.0, %v1969
  %v1971 = vpop.f32.mrb[0].mxu0
  %v1972 = vpop.f32.mrb[0].mxu0
  %v1973 = vadd.f32 0.0, %v1972
  %v1974 = vpop.f32.mrb[0].mxu0
  %1975 = vmatprep.mubr.bf16.mxu0 0
  %1976 = vmatmul.mubr.bf16.gmra.mrb[0].mxu0 %v1850
  %v1977 = vpop.f32.mrb[0].mxu0
  %v1978 = vadd.f32 0.0, %v1977
  %v1979 = vpop.f32.mrb[0].mxu0
  %v1980 = vpop.f32.mrb[0].mxu0
  %v1981 = vadd.f32 0.0, %v1980
  %v1982 = vpop.f32.mrb[0].mxu0
  %1983 = vmatprep.mubr.bf16.mxu0 0
  %1984 = vmatmul.mubr.bf16.gmra.mrb[0].mxu0 %v1851
  %v1985 = vpop.f32.mrb[0].mxu0
  %v1986 = vadd.f32 0.0, %v1985
  %v1987 = vpop.f32.mrb[0].mxu0
  %v1988 = vpop.f32.mrb[0].mxu0
  %v1989 = vadd.f32 0.0, %v1988
  %v1990 = vpop.f32.mrb[0].mxu0
  %1991 = vmatprep.mubr.bf16.mxu0 0
  %1992 = vmatmul.mubr.bf16.gmra.mrb[0].mxu0 %v1852
  %v1993 = vpop.f32.mrb[0].mxu0
  %v1994 = vadd.f32 0.0, %v1993
  %v1995 = vpop.f32.mrb[0].mxu0
  %v1996 = vpop.f32.mrb[0].mxu0
  %v1997 = vadd.f32 0.0, %v1996
  %v1998 = vpop.f32.mrb[0].mxu0
  %1999 = vmatprep.mubr.bf16.mxu0 0
  %2000 = vmatmul.mubr.bf16.gmra.mrb[0].mxu0 %v1853
  %v2001 = vpop.f32.mrb[0].mxu0
  %v2002 = vadd.f32 0.0, %v2001
  %v2003 = vpop.f32.mrb[0].mxu0
  %v2004 = vpop.f32.mrb[0].mxu0
  %v2005 = vadd.f32 0.0, %v2004
  %v2006 = vpop.f32.mrb[0].mxu0
  %2007 = vmatprep.mubr.bf16.mxu0 0
  %2008 = vmatmul.mubr.bf16.gmra.mrb[0].mxu0 %v1854
  %v2009 = vpop.f32.mrb[0].mxu0
  %v2010 = vadd.f32 0.0, %v2009
  %v2011 = vpop.f32.mrb[0].mxu0
  %v2012 = vpop.f32.mrb[0].mxu0
  %v2013 = vadd.f32 0.0, %v2012
  %v2014 = vpop.f32.mrb[0].mxu0
  %2015 = vdwg.mxu0
  %2016 = vst [vmem:[%s4] sm:$0xff] %v1954
  %2017 = vst [vmem:[%s4 + $0x8] sm:$0xff] %v1957
  %2018 = vst [vmem:[%s4 + $0x10] sm:$0xff] %v1962
  %2019 = vst [vmem:[%s4 + $0x18] sm:$0xff] %v1965
  %2020 = vst [vmem:[%s4 + $0x20] sm:$0xff] %v1970
  %2021 = vst [vmem:[%s4 + $0x28] sm:$0xff] %v1973
  %2022 = vst [vmem:[%s4 + $0x30] sm:$0xff] %v1978
  %2023 = vst [vmem:[%s4 + $0x38] sm:$0xff] %v1981
  %2024 = vst [vmem:[%s4 + $0x40] sm:$0xff] %v1986
  %2025 = vst [vmem:[%s4 + $0x48] sm:$0xff] %v1989
  %2026 = vst [vmem:[%s4 + $0x50] sm:$0xff] %v1994
  %2027 = vst [vmem:[%s4 + $0x58] sm:$0xff] %v1997
  %2028 = vst [vmem:[%s4 + $0x60] sm:$0xff] %v2002
  %2029 = vst [vmem:[%s4 + $0x68] sm:$0xff] %v2005
  %2030 = vst [vmem:[%s4 + $0x70] sm:$0xff] %v2010
  %2031 = vst [vmem:[%s4 + $0x78] sm:$0xff] %v2013
  // Predicated region
  $region18: #{_mfcc_forward_jit.1} parent=0 // pred_check
    _
  $region19: #{_mfcc_forward_jit.1} parent=0 // pred_check_branch
    %2033 = sbr.rel (0) target = $region21
  $region20: #{_mfcc_forward_jit.1} parent=0 // pred_region
    _
  $region21: #{_mfcc_forward_jit.1} parent=0 // pred_fallthru
    _
  // Predicated region
  $region22: #{_mfcc_forward_jit.1} parent=0 // pred_check
    _
  $region23: #{_mfcc_forward_jit.1} parent=0 // pred_check_branch
    %2035 = sbr.rel (0) target = $region25
  $region24: #{_mfcc_forward_jit.1} parent=0 // pred_region
    _
  $region25: #{_mfcc_forward_jit.1} parent=0 // pred_fallthru
    _

</llo_original>
